<compile_context>
chip_gen: v6e
topology: v6e:2x2x1
jax: 0.10.0
libtpu: 0.0.40
codegen_flags: <defaults>
</compile_context>

<pallas_src>
import functools

import jax
import jax.numpy as jnp
from jax import lax
from jax.experimental import pallas as pl
from jax.experimental.pallas import tpu as pltpu

KSIZE = 15
PAD = 7

_PFE_CFG = {
    3: dict(crop_size=124, pooling_size=40, stride=128),
    4: dict(crop_size=38, pooling_size=38, stride=64),
    5: dict(crop_size=0, pooling_size=32, stride=32),
}


# --------------------------- XLA-side matrix builders ---------------------------
def _band(taps, n_rows, n_cols, diag):
    """Banded matrix M with M[i, j] = taps[d], d = j-i ('col-row') or i-j ('row-col')."""
    i = jnp.arange(n_rows)[:, None]
    j = jnp.arange(n_cols)[None, :]
    d = (j - i) if diag == "col-row" else (i - j)
    valid = jnp.logical_and(d >= 0, d < KSIZE)
    taps = taps.astype(jnp.float32)
    return jnp.where(valid, taps[jnp.clip(d, 0, KSIZE - 1)], 0.0)


def _pool_matrix(n_windows, n_in, off, ps, st):
    """P[o, i] = 1 if input index i falls inside pooling window o."""
    o = jnp.arange(n_windows)[:, None]
    i = jnp.arange(n_in)[None, :]
    start = off + o * st
    return jnp.logical_and(i >= start, i < start + ps).astype(jnp.float32)


def _block_diag(m, b):
    return jnp.kron(jnp.eye(b, dtype=m.dtype), m)


def _const_spec(arr):
    nd = arr.ndim
    return pl.BlockSpec(arr.shape, lambda *_: (0,) * nd)


def _choose_bblk(N, C, Hp8, Wp):
    """Images packed along the lane axis per grid step."""
    b = max(1, -(-128 // Wp))          # target >= 128 lanes
    b = min(b, N)
    while b > 1 and -(-N // b) < 2:    # keep >= 2 grid steps (megacore) when N allows
        b -= 1
    while b > 1 and C * Hp8 * b * Wp * 4 > (4 << 20):   # cap per-step x block ~4 MiB
        b -= 1
    return b


# ----------------------------------- kernel -----------------------------------
def _make_kernel(C, H, W, Hp8, Wp, Bblk, store_xi, pool_cfg):
    L_in = Bblk * Wp      # packed padded width (lane axis of x / t1 / b1-rhs)
    L_out = Bblk * W      # packed valid width (lane axis of xi)

    def kernel(*refs):
        it = iter(refs)
        x_ref = next(it)
        a1_ref = next(it)      # (H, C*Hp8)        top first conv (15,1), banded
        b2w_ref = next(it)     # (B*Wp, B*W)       top second conv (1,15), block-diag banded
        bw_ref = next(it)      # (C, B*Wp, B*W)    bottom first conv (1,15), block-diag banded
        a2_ref = next(it)      # (H, Hp8)          bottom second conv (15,1), banded
        if pool_cfg is not None:
            ph_ref = next(it)  # (oh_n, H)
            pw_ref = next(it)  # (B*W, B*ow_n)
        bias_ref = next(it)    # (1, 4) in SMEM
        if store_xi:
            xi_ref = next(it)
        if pool_cfg is not None:
            pool_ref = next(it)

        x = x_ref[...].astype(jnp.float32)        # (C*Hp8, B*Wp)

        # ---- top branch: (15,1) conv as banded left-matmul over H, then (1,15) ----
        t1 = jnp.dot(a1_ref[...], x, preferred_element_type=jnp.float32)      # (H, B*Wp)
        lane = lax.broadcasted_iota(jnp.int32, (1, L_in), 1) % Wp
        w_valid = jnp.logical_and(lane >= PAD, lane < PAD + W)
        # zero-pad-after-bias semantics of the intermediate map
        t1 = jnp.where(w_valid, t1 + bias_ref[0, 0], 0.0)
        t2 = jnp.dot(t1, b2w_ref[...], preferred_element_type=jnp.float32) + bias_ref[0, 1]

        # ---- bottom branch: (1,15) conv as banded right-matmul over W, then (15,1) ----
        b1 = jnp.zeros((Hp8, L_out), jnp.float32)
        for c in range(C):
            b1 = b1 + jnp.dot(x[c * Hp8:(c + 1) * Hp8, :], bw_ref[c],
                              preferred_element_type=jnp.float32)
        row = lax.broadcasted_iota(jnp.int32, (Hp8, 1), 0)
        h_valid = jnp.logical_and(row >= PAD, row < PAD + H)
        b1 = jnp.where(h_valid, b1 + bias_ref[0, 2], 0.0)
        b2 = jnp.dot(a2_ref[...], b1, preferred_element_type=jnp.float32) + bias_ref[0, 3]

        xi = t2 + b2                               # (H, B*W)
        if store_xi:
            xi_ref[...] = xi.astype(xi_ref.dtype)

        # ---- fused crop + avg-pool epilogue: separable reduction on the MXU ----
        if pool_cfg is not None:
            ps = pool_cfg[1]
            inv = 1.0 / float(ps * ps)
            rowsum = jnp.dot(ph_ref[...], xi, preferred_element_type=jnp.float32)   # (oh_n, B*W)
            pooled = jnp.dot(rowsum, pw_ref[...], preferred_element_type=jnp.float32) * inv
            pool_ref[...] = pooled.astype(pool_ref.dtype)

    return kernel


# ----------------------------------- wrapper -----------------------------------
@functools.partial(jax.jit, static_argnames=("pfe_id", "training_mode", "alpha"))
def pfe_forward(x, wt1, bt1, wt2, bt2, wb1, bb1, wb2, bb2, *,
                pfe_id, training_mode, alpha=16):
    assert 2 <= pfe_id <= 5
    N, C, H, W = x.shape
    Hp, Wp = H + 2 * PAD, W + 2 * PAD
    Hp8 = -(-Hp // 8) * 8                          # sublane-aligned padded height

    # --- pooling configuration (static) ---
    if pfe_id == 2:
        pool_cfg = None
    else:
        cfg = _PFE_CFG[pfe_id]
        off = cfg["crop_size"] // 2
        ps = cfg["pooling_size"]
        st = cfg["stride"] if training_mode else cfg["stride"] // alpha
        assert st >= 1, "stride // alpha must be >= 1"
        hc, wc = H - 2 * off, W - 2 * off
        assert hc >= ps and wc >= ps, "input too small for this pfe_id's crop/pool"
        oh_n = (hc - ps) // st + 1
        ow_n = (wc - ps) // st + 1
        pool_cfg = (off, ps, st, oh_n, ow_n)

    store_xi = (pfe_id == 2) or training_mode

    # --- batch packing along the lane axis ---
    Bblk = _choose_bblk(N, C, Hp8, Wp)
    Nb = -(-N // Bblk)
    N_pad = Nb * Bblk

    # single zero-halo pad + pack Bblk images side-by-side along W (lane) axis
    x_pad = jnp.pad(x, ((0, N_pad - N), (0, 0), (PAD, Hp8 - H - PAD), (PAD, PAD)))
    x_packed = x_pad.reshape(Nb, Bblk, C, Hp8, Wp).transpose(0, 2, 3, 1, 4)
    x_packed = x_packed.reshape(Nb, C * Hp8, Bblk * Wp)

    # --- banded weight matrices (tiny, shared across grid steps) ---
    wt1_s = wt1[0, :, :, 0].astype(jnp.float32)       # (C, 15)  Conv2d(C->1, (15,1))
    wt2_s = wt2.reshape(KSIZE).astype(jnp.float32)    # (15,)    Conv2d(1->1, (1,15))
    wb1_s = wb1[0, :, 0, :].astype(jnp.float32)       # (C, 15)  Conv2d(C->1, (1,15))
    wb2_s = wb2.reshape(KSIZE).astype(jnp.float32)    # (15,)    Conv2d(1->1, (15,1))

    a1_full = jnp.concatenate([_band(wt1_s[c], H, Hp8, "col-row") for c in range(C)], axis=1)
    b2w_full = _block_diag(_band(wt2_s, Wp, W, "row-col"), Bblk)
    bw_full = jnp.stack([_block_diag(_band(wb1_s[c], Wp, W, "row-col"), Bblk)
                         for c in range(C)])
    a2_full = _band(wb2_s, H, Hp8, "col-row")
    bias_s = jnp.stack([bt1[0], bt2[0], bb1[0], bb2[0]]).astype(jnp.float32).reshape(1, 4)

    inputs = [x_packed, a1_full, b2w_full, bw_full, a2_full]
    in_specs = [
        pl.BlockSpec((None, C * Hp8, Bblk * Wp), lambda n: (n, 0, 0)),
        _const_spec(a1_full), _const_spec(b2w_full),
        _const_spec(bw_full), _const_spec(a2_full),
    ]
    if pool_cfg is not None:
        off, ps, st, oh_n, ow_n = pool_cfg
        ph = _pool_matrix(oh_n, H, off, ps, st)                           # (oh_n, H)
        pw = _block_diag(_pool_matrix(ow_n, W, off, ps, st).T, Bblk)      # (B*W, B*ow_n)
        inputs += [ph, pw]
        in_specs += [_const_spec(ph), _const_spec(pw)]
    inputs.append(bias_s)
    in_specs.append(pl.BlockSpec(memory_space=pltpu.MemorySpace.SMEM))

    out_shape, out_specs = [], []
    if store_xi:
        out_shape.append(jax.ShapeDtypeStruct((Nb, H, Bblk * W), x.dtype))
        out_specs.append(pl.BlockSpec((None, H, Bblk * W), lambda n: (n, 0, 0)))
    if pool_cfg is not None:
        _, _, _, oh_n, ow_n = pool_cfg
        out_shape.append(jax.ShapeDtypeStruct((Nb, oh_n, Bblk * ow_n), x.dtype))
        out_specs.append(pl.BlockSpec((None, oh_n, Bblk * ow_n), lambda n: (n, 0, 0)))

    kernel = _make_kernel(C, H, W, Hp8, Wp, Bblk, store_xi, pool_cfg)

    outs = pl.pallas_call(
        kernel,
        out_shape=tuple(out_shape),
        grid=(Nb,),
        in_specs=in_specs,
        out_specs=tuple(out_specs),
        compiler_params=pltpu.CompilerParams(dimension_semantics=("parallel",)),
    )(*inputs)
    outs = list(outs)

    def _unpack(arr, d1, d2):
        # (Nb, d1, Bblk*d2) -> (N, 1, d1, d2)
        a = arr.reshape(Nb, d1, Bblk, d2).transpose(0, 2, 1, 3).reshape(N_pad, d1, d2)
        return a[:N, None, :, :]

    xi = pooled = None
    if store_xi:
        xi = _unpack(outs.pop(0), H, W)
    if pool_cfg is not None:
        _, _, _, oh_n, ow_n = pool_cfg
        pooled = _unpack(outs.pop(0), oh_n, ow_n)

    if pfe_id == 2:
        return xi
    if training_mode:
        return xi, pooled
    return pooled


# ----------------------------- pure-JAX reference -----------------------------
def ref_forward(x, wt1, bt1, wt2, bt2, wb1, bb1, wb2, bb2, *,
                pfe_id, training_mode, alpha=16):
    dn = ("NCHW", "OIHW", "NCHW")
    hp = lax.Precision.HIGHEST
    top = lax.conv_general_dilated(x, wt1, (1, 1), [(PAD, PAD), (0, 0)],
                                   dimension_numbers=dn, precision=hp) + bt1.reshape(1, -1, 1, 1)
    top = lax.conv_general_dilated(top, wt2, (1, 1), [(0, 0), (PAD, PAD)],
                                   dimension_numbers=dn, precision=hp) + bt2.reshape(1, -1, 1, 1)
    bot = lax.conv_general_dilated(x, wb1, (1, 1), [(0, 0), (PAD, PAD)],
                                   dimension_numbers=dn, precision=hp) + bb1.reshape(1, -1, 1, 1)
    bot = lax.conv_general_dilated(bot, wb2, (1, 1), [(PAD, PAD), (0, 0)],
                                   dimension_numbers=dn, precision=hp) + bb2.reshape(1, -1, 1, 1)
    xi = top + bot
    if pfe_id == 2:
        return xi
    cfg = _PFE_CFG[pfe_id]
    off = cfg["crop_size"] // 2
    ps = cfg["pooling_size"]
    st = cfg["stride"] if training_mode else cfg["stride"] // alpha
    h, w = xi.shape[2:]
    crop = xi[:, :, off:h - off, off:w - off]
    pooled = lax.reduce_window(crop, 0.0, lax.add, (1, 1, ps, ps),
                               (1, 1, st, st), "VALID") / float(ps * ps)
    if training_mode:
        return xi, pooled
    return pooled


# ------------------------------------ test ------------------------------------
def _assert_close(a, b, name):
    diff = float(jnp.max(jnp.abs(a - b)))
    assert a.shape == b.shape, (name, a.shape, b.shape)
    assert jnp.allclose(a, b, atol=2e-3, rtol=2e-3), (name, diff)


if __name__ == "__main__":
    C = 4
    key = jax.random.PRNGKey(0)
    ks = jax.random.split(key, 6)

    def conv_init(kk, shape):       # PyTorch-style Conv2d init (deterministic)
        fan_in = shape[1] * shape[2] * shape[3]
        bound = 1.0 / (fan_in ** 0.5)
        kw_, kb_ = jax.random.split(kk)
        w = jax.random.uniform(kw_, shape, jnp.float32, -bound, bound)
        b = jax.random.uniform(kb_, (shape[0],), jnp.float32, -bound, bound)
        return w, b

    wt1, bt1 = conv_init(ks[1], (1, C, KSIZE, 1))   # conv_top_1
    wt2, bt2 = conv_init(ks[2], (1, 1, 1, KSIZE))   # conv_top_2
    wb1, bb1 = conv_init(ks[3], (1, C, 1, KSIZE))   # conv_bottom_1
    wb2, bb2 = conv_init(ks[4], (1, 1, KSIZE, 1))   # conv_bottom_2
    params = (wt1, bt1, wt2, bt2, wb1, bb1, wb2, bb2)

    x_small = jax.random.normal(ks[0], (2, C, 32, 32), jnp.float32)
    x_large = jax.random.normal(ks[5], (5, C, 64, 64), jnp.float32)

    # 1) pfe_id=5, training: returns (xi, pooled)
    out = pfe_forward(x_small, *params, pfe_id=5, training_mode=True)
    jax.block_until_ready(out)
    ref = ref_forward(x_small, *params, pfe_id=5, training_mode=True)
    _assert_close(out[0], ref[0], "xi_train")
    _assert_close(out[1], ref[1], "pool_train")

    # 2) pfe_id=5, inference: returns pooled only (no xi HBM writeback)
    out = pfe_forward(x_small, *params, pfe_id=5, training_mode=False)
    jax.block_until_ready(out)
    ref = ref_forward(x_small, *params, pfe_id=5, training_mode=False)
    _assert_close(out, ref, "pool_infer_small")

    # 3) pfe_id=2: returns xi only
    out = pfe_forward(x_small, *params, pfe_id=2, training_mode=True)
    jax.block_until_ready(out)
    ref = ref_forward(x_small, *params, pfe_id=2, training_mode=True)
    _assert_close(out, ref, "xi_pfe2")

    # 4) larger/odd batch, inference with overlapping windows (lane packing + batch pad)
    out = pfe_forward(x_large, *params, pfe_id=5, training_mode=False)
    jax.block_until_ready(out)
    ref = ref_forward(x_large, *params, pfe_id=5, training_mode=False)
    _assert_close(out, ref, "pool_infer_large")

    print("KERNEL_OK")
</pallas_src>

<mosaic_0001>
module attributes {stable_mosaic.version = 11 : i64} {
  func.func @kernel(%arg0: i32, %arg1: memref<1x192x46xf32, #tpu.memory_space<vmem>>, %arg2: memref<32x192xf32, #tpu.memory_space<vmem>>, %arg3: memref<46x32xf32, #tpu.memory_space<vmem>>, %arg4: memref<4x46x32xf32, #tpu.memory_space<vmem>>, %arg5: memref<32x48xf32, #tpu.memory_space<vmem>>, %arg6: memref<1x32xf32, #tpu.memory_space<vmem>>, %arg7: memref<32x1xf32, #tpu.memory_space<vmem>>, %arg8: memref<1x4xf32, #tpu.memory_space<smem>>, %arg9: memref<1x32x32xf32, #tpu.memory_space<vmem>>, %arg10: memref<1x1x1xf32, #tpu.memory_space<vmem>>) attributes {dimension_semantics = [#tpu.dimension_semantics<parallel>], iteration_bounds = array<i64: 2>, scalar_prefetch = 0 : i64, scratch_operands = 0 : i64, tpu.core_type = #tpu.core_type<tc>, window_params = [{transform_indices = @transform_0, window_bounds = array<i64: 1, 192, 46>}, {pipeline_mode = #tpu.pipeline_mode<synchronous>, transform_indices = @transform_1, window_bounds = array<i64: 32, 192>}, {pipeline_mode = #tpu.pipeline_mode<synchronous>, transform_indices = @transform_2, window_bounds = array<i64: 46, 32>}, {pipeline_mode = #tpu.pipeline_mode<synchronous>, transform_indices = @transform_3, window_bounds = array<i64: 4, 46, 32>}, {pipeline_mode = #tpu.pipeline_mode<synchronous>, transform_indices = @transform_4, window_bounds = array<i64: 32, 48>}, {pipeline_mode = #tpu.pipeline_mode<synchronous>, transform_indices = @transform_5, window_bounds = array<i64: 1, 32>}, {pipeline_mode = #tpu.pipeline_mode<synchronous>, transform_indices = @transform_6, window_bounds = array<i64: 32, 1>}, {transform_indices = @transform_7, window_bounds = array<i64: 1, 4>}, {transform_indices = @transform_8, window_bounds = array<i64: 1, 32, 32>}, {transform_indices = @transform_9, window_bounds = array<i64: 1, 1, 1>}]} {
    %c0 = arith.constant 0 : index
    %c0_0 = arith.constant 0 : index
    %c0_1 = arith.constant 0 : index
    %0 = vector.load %arg1[%c0, %c0_0, %c0_1] : memref<1x192x46xf32, #tpu.memory_space<vmem>>, vector<1x192x46xf32>
    %1 = vector.shape_cast %0 : vector<1x192x46xf32> to vector<192x46xf32>
    %c0_2 = arith.constant 0 : index
    %c0_3 = arith.constant 0 : index
    %2 = vector.load %arg2[%c0_2, %c0_3] : memref<32x192xf32, #tpu.memory_space<vmem>>, vector<32x192xf32>
    %cst = arith.constant dense<0.000000e+00> : vector<32x46xf32>
    %3 = tpu.matmul %2, %1, %cst {dimension_numbers = #tpu.dot_dimension_numbers<[1], [0], [0], [1], [0, 0, 1, 1], [], []>} : vector<32x192xf32>, vector<192x46xf32>, vector<32x46xf32> -> vector<32x46xf32>
    %4 = tpu.iota {dimensions = array<i32: 1>} : vector<1x46xi32>
    %c46_i32 = arith.constant 46 : i32
    %c0_i32 = arith.constant 0 : i32
    %5 = arith.cmpi eq, %c46_i32, %c0_i32 : i32
    %c1_i32 = arith.constant 1 : i32
    %6 = arith.select %5, %c1_i32, %c46_i32 : i32
    %7 = vector.broadcast %6 : i32 to vector<1x46xi32>
    %8 = arith.remsi %4, %7 : vector<1x46xi32>
    %c0_i32_4 = arith.constant 0 : i32
    %9 = vector.broadcast %c0_i32_4 : i32 to vector<1x46xi32>
    %10 = arith.cmpi ne, %8, %9 : vector<1x46xi32>
    %c0_i32_5 = arith.constant 0 : i32
    %11 = vector.broadcast %c0_i32_5 : i32 to vector<1x46xi32>
    %12 = arith.cmpi slt, %8, %11 : vector<1x46xi32>
    %c0_i32_6 = arith.constant 0 : i32
    %13 = arith.cmpi slt, %6, %c0_i32_6 : i32
    %14 = vector.broadcast %13 : i1 to vector<1x46xi1>
    %15 = vector.broadcast %14 : vector<1x46xi1> to vector<1x46xi1>
    %16 = arith.xori %12, %15 : vector<1x46xi1>
    %17 = arith.andi %16, %10 : vector<1x46xi1>
    %18 = vector.broadcast %6 : i32 to vector<1x46xi32>
    %19 = arith.addi %8, %18 : vector<1x46xi32>
    %20 = arith.select %17, %19, %8 : vector<1x46xi1>, vector<1x46xi32>
    %c7_i32 = arith.constant 7 : i32
    %21 = vector.broadcast %c7_i32 : i32 to vector<1x46xi32>
    %22 = arith.cmpi sge, %20, %21 : vector<1x46xi32>
    %c39_i32 = arith.constant 39 : i32
    %23 = vector.broadcast %c39_i32 : i32 to vector<1x46xi32>
    %24 = arith.cmpi slt, %20, %23 : vector<1x46xi32>
    %25 = arith.andi %22, %24 : vector<1x46xi1>
    %c0_7 = arith.constant 0 : index
    %c0_8 = arith.constant 0 : index
    %26 = memref.load %arg8[%c0_7, %c0_8] : memref<1x4xf32, #tpu.memory_space<smem>>
    %27 = vector.broadcast %26 : f32 to vector<32x46xf32>
    %28 = arith.addf %3, %27 : vector<32x46xf32>
    %cst_9 = arith.constant 0.000000e+00 : f32
    %29 = vector.shape_cast %25 : vector<1x46xi1> to vector<1x46xi1>
    %30 = vector.broadcast %29 : vector<1x46xi1> to vector<32x46xi1>
    %31 = vector.broadcast %cst_9 : f32 to vector<32x46xf32>
    %32 = arith.select %30, %28, %31 : vector<32x46xi1>, vector<32x46xf32>
    %c0_10 = arith.constant 0 : index
    %c0_11 = arith.constant 0 : index
    %33 = vector.load %arg3[%c0_10, %c0_11] : memref<46x32xf32, #tpu.memory_space<vmem>>, vector<46x32xf32>
    %cst_12 = arith.constant dense<0.000000e+00> : vector<32x32xf32>
    %34 = tpu.matmul %32, %33, %cst_12 {dimension_numbers = #tpu.dot_dimension_numbers<[1], [0], [0], [1], [0, 0, 1, 1], [], []>} : vector<32x46xf32>, vector<46x32xf32>, vector<32x32xf32> -> vector<32x32xf32>
    %c0_13 = arith.constant 0 : index
    %c1 = arith.constant 1 : index
    %35 = memref.load %arg8[%c0_13, %c1] : memref<1x4xf32, #tpu.memory_space<smem>>
    %36 = vector.broadcast %35 : f32 to vector<32x32xf32>
    %37 = arith.addf %34, %36 : vector<32x32xf32>
    %cst_14 = arith.constant 0.000000e+00 : f32
    %38 = vector.broadcast %cst_14 : f32 to vector<48x32xf32>
    %39 = vector.extract_strided_slice %1 {offsets = [0, 0], sizes = [48, 46], strides = [1, 1]} : vector<192x46xf32> to vector<48x46xf32>
    %c0_15 = arith.constant 0 : index
    %c0_16 = arith.constant 0 : index
    %c0_17 = arith.constant 0 : index
    %40 = vector.load %arg4[%c0_15, %c0_16, %c0_17] : memref<4x46x32xf32, #tpu.memory_space<vmem>>, vector<1x46x32xf32>
    %41 = vector.shape_cast %40 : vector<1x46x32xf32> to vector<46x32xf32>
    %cst_18 = arith.constant dense<0.000000e+00> : vector<48x32xf32>
    %42 = tpu.matmul %39, %41, %cst_18 {dimension_numbers = #tpu.dot_dimension_numbers<[1], [0], [0], [1], [0, 0, 1, 1], [], []>} : vector<48x46xf32>, vector<46x32xf32>, vector<48x32xf32> -> vector<48x32xf32>
    %43 = arith.addf %38, %42 : vector<48x32xf32>
    %44 = vector.extract_strided_slice %1 {offsets = [48, 0], sizes = [48, 46], strides = [1, 1]} : vector<192x46xf32> to vector<48x46xf32>
    %c1_19 = arith.constant 1 : index
    %c0_20 = arith.constant 0 : index
    %c0_21 = arith.constant 0 : index
    %45 = vector.load %arg4[%c1_19, %c0_20, %c0_21] : memref<4x46x32xf32, #tpu.memory_space<vmem>>, vector<1x46x32xf32>
    %46 = vector.shape_cast %45 : vector<1x46x32xf32> to vector<46x32xf32>
    %cst_22 = arith.constant dense<0.000000e+00> : vector<48x32xf32>
    %47 = tpu.matmul %44, %46, %cst_22 {dimension_numbers = #tpu.dot_dimension_numbers<[1], [0], [0], [1], [0, 0, 1, 1], [], []>} : vector<48x46xf32>, vector<46x32xf32>, vector<48x32xf32> -> vector<48x32xf32>
    %48 = arith.addf %43, %47 : vector<48x32xf32>
    %49 = vector.extract_strided_slice %1 {offsets = [96, 0], sizes = [48, 46], strides = [1, 1]} : vector<192x46xf32> to vector<48x46xf32>
    %c2 = arith.constant 2 : index
    %c0_23 = arith.constant 0 : index
    %c0_24 = arith.constant 0 : index
    %50 = vector.load %arg4[%c2, %c0_23, %c0_24] : memref<4x46x32xf32, #tpu.memory_space<vmem>>, vector<1x46x32xf32>
    %51 = vector.shape_cast %50 : vector<1x46x32xf32> to vector<46x32xf32>
    %cst_25 = arith.constant dense<0.000000e+00> : vector<48x32xf32>
    %52 = tpu.matmul %49, %51, %cst_25 {dimension_numbers = #tpu.dot_dimension_numbers<[1], [0], [0], [1], [0, 0, 1, 1], [], []>} : vector<48x46xf32>, vector<46x32xf32>, vector<48x32xf32> -> vector<48x32xf32>
    %53 = arith.addf %48, %52 : vector<48x32xf32>
    %54 = vector.extract_strided_slice %1 {offsets = [144, 0], sizes = [48, 46], strides = [1, 1]} : vector<192x46xf32> to vector<48x46xf32>
    %c3 = arith.constant 3 : index
    %c0_26 = arith.constant 0 : index
    %c0_27 = arith.constant 0 : index
    %55 = vector.load %arg4[%c3, %c0_26, %c0_27] : memref<4x46x32xf32, #tpu.memory_space<vmem>>, vector<1x46x32xf32>
    %56 = vector.shape_cast %55 : vector<1x46x32xf32> to vector<46x32xf32>
    %cst_28 = arith.constant dense<0.000000e+00> : vector<48x32xf32>
    %57 = tpu.matmul %54, %56, %cst_28 {dimension_numbers = #tpu.dot_dimension_numbers<[1], [0], [0], [1], [0, 0, 1, 1], [], []>} : vector<48x46xf32>, vector<46x32xf32>, vector<48x32xf32> -> vector<48x32xf32>
    %58 = arith.addf %53, %57 : vector<48x32xf32>
    %59 = tpu.iota {dimensions = array<i32: 0>} : vector<48x1xi32>
    %c7_i32_29 = arith.constant 7 : i32
    %60 = vector.broadcast %c7_i32_29 : i32 to vector<48x1xi32>
    %61 = arith.cmpi sge, %59, %60 : vector<48x1xi32>
    %c39_i32_30 = arith.constant 39 : i32
    %62 = vector.broadcast %c39_i32_30 : i32 to vector<48x1xi32>
    %63 = arith.cmpi slt, %59, %62 : vector<48x1xi32>
    %64 = arith.andi %61, %63 : vector<48x1xi1>
    %c0_31 = arith.constant 0 : index
    %c2_32 = arith.constant 2 : index
    %65 = memref.load %arg8[%c0_31, %c2_32] : memref<1x4xf32, #tpu.memory_space<smem>>
    %66 = vector.broadcast %65 : f32 to vector<48x32xf32>
    %67 = arith.addf %58, %66 : vector<48x32xf32>
    %cst_33 = arith.constant 0.000000e+00 : f32
    %68 = vector.shape_cast %64 : vector<48x1xi1> to vector<48x1xi1>
    %69 = vector.broadcast %68 : vector<48x1xi1> to vector<48x32xi1>
    %70 = vector.broadcast %cst_33 : f32 to vector<48x32xf32>
    %71 = arith.select %69, %67, %70 : vector<48x32xi1>, vector<48x32xf32>
    %c0_34 = arith.constant 0 : index
    %c0_35 = arith.constant 0 : index
    %72 = vector.load %arg5[%c0_34, %c0_35] : memref<32x48xf32, #tpu.memory_space<vmem>>, vector<32x48xf32>
    %cst_36 = arith.constant dense<0.000000e+00> : vector<32x32xf32>
    %73 = tpu.matmul %72, %71, %cst_36 {dimension_numbers = #tpu.dot_dimension_numbers<[1], [0], [0], [1], [0, 0, 1, 1], [], []>} : vector<32x48xf32>, vector<48x32xf32>, vector<32x32xf32> -> vector<32x32xf32>
    %c0_37 = arith.constant 0 : index
    %c3_38 = arith.constant 3 : index
    %74 = memref.load %arg8[%c0_37, %c3_38] : memref<1x4xf32, #tpu.memory_space<smem>>
    %75 = vector.broadcast %74 : f32 to vector<32x32xf32>
    %76 = arith.addf %73, %75 : vector<32x32xf32>
    %77 = arith.addf %37, %76 : vector<32x32xf32>
    %c0_39 = arith.constant 0 : index
    %c0_40 = arith.constant 0 : index
    %c0_41 = arith.constant 0 : index
    %78 = vector.load %arg9[%c0_39, %c0_40, %c0_41] : memref<1x32x32xf32, #tpu.memory_space<vmem>>, vector<1x32x32xf32>
    %79 = vector.shape_cast %78 : vector<1x32x32xf32> to vector<32x32xf32>
    %80 = vector.shape_cast %77 : vector<32x32xf32> to vector<1x32x32xf32>
    tpu.vector_store %arg9[%c0_39, %c0_40, %c0_41], %80 {strides = array<i32>} : memref<1x32x32xf32, #tpu.memory_space<vmem>>, vector<1x32x32xf32>,
    %c0_42 = arith.constant 0 : index
    %c0_43 = arith.constant 0 : index
    %81 = vector.load %arg6[%c0_42, %c0_43] : memref<1x32xf32, #tpu.memory_space<vmem>>, vector<1x32xf32>
    %cst_44 = arith.constant dense<0.000000e+00> : vector<1x32xf32>
    %82 = tpu.matmul %81, %77, %cst_44 {dimension_numbers = #tpu.dot_dimension_numbers<[1], [0], [0], [1], [0, 0, 1, 1], [], []>} : vector<1x32xf32>, vector<32x32xf32>, vector<1x32xf32> -> vector<1x32xf32>
    %c0_45 = arith.constant 0 : index
    %c0_46 = arith.constant 0 : index
    %83 = vector.load %arg7[%c0_45, %c0_46] : memref<32x1xf32, #tpu.memory_space<vmem>>, vector<32x1xf32>
    %cst_47 = arith.constant dense<0.000000e+00> : vector<1x1xf32>
    %84 = tpu.matmul %82, %83, %cst_47 {dimension_numbers = #tpu.dot_dimension_numbers<[1], [0], [0], [1], [0, 0, 1, 1], [], []>} : vector<1x32xf32>, vector<32x1xf32>, vector<1x1xf32> -> vector<1x1xf32>
    %cst_48 = arith.constant 9.765625E-4 : f32
    %85 = vector.broadcast %cst_48 : f32 to vector<1x1xf32>
    %86 = arith.mulf %84, %85 : vector<1x1xf32>
    %c0_49 = arith.constant 0 : index
    %c0_50 = arith.constant 0 : index
    %c0_51 = arith.constant 0 : index
    %87 = vector.load %arg10[%c0_49, %c0_50, %c0_51] : memref<1x1x1xf32, #tpu.memory_space<vmem>>, vector<1x1x1xf32>
    %88 = vector.shape_cast %87 : vector<1x1x1xf32> to vector<1x1xf32>
    %89 = vector.shape_cast %86 : vector<1x1xf32> to vector<1x1x1xf32>
    tpu.vector_store %arg10[%c0_49, %c0_50, %c0_51], %89 {strides = array<i32>} : memref<1x1x1xf32, #tpu.memory_space<vmem>>, vector<1x1x1xf32>,
    return
  }
  func.func @transform_0(%arg0: i32) -> (i32, i32, i32) {
    %c0_i32 = arith.constant 0 : i32
    %c0_i32_0 = arith.constant 0 : i32
    %c0_i32_1 = arith.constant 0 : i32
    return %arg0, %c0_i32, %c0_i32_0 : i32, i32, i32
  }
  func.func @transform_1(%arg0: i32) -> (i32, i32) {
    %c0_i32 = arith.constant 0 : i32
    %c0_i32_0 = arith.constant 0 : i32
    %c0_i32_1 = arith.constant 0 : i32
    return %c0_i32, %c0_i32_0 : i32, i32
  }
  func.func @transform_2(%arg0: i32) -> (i32, i32) {
    %c0_i32 = arith.constant 0 : i32
    %c0_i32_0 = arith.constant 0 : i32
    %c0_i32_1 = arith.constant 0 : i32
    return %c0_i32, %c0_i32_0 : i32, i32
  }
  func.func @transform_3(%arg0: i32) -> (i32, i32, i32) {
    %c0_i32 = arith.constant 0 : i32
    %c0_i32_0 = arith.constant 0 : i32
    %c0_i32_1 = arith.constant 0 : i32
    %c0_i32_2 = arith.constant 0 : i32
    return %c0_i32, %c0_i32_0, %c0_i32_1 : i32, i32, i32
  }
  func.func @transform_4(%arg0: i32) -> (i32, i32) {
    %c0_i32 = arith.constant 0 : i32
    %c0_i32_0 = arith.constant 0 : i32
    %c0_i32_1 = arith.constant 0 : i32
    return %c0_i32, %c0_i32_0 : i32, i32
  }
  func.func @transform_5(%arg0: i32) -> (i32, i32) {
    %c0_i32 = arith.constant 0 : i32
    %c0_i32_0 = arith.constant 0 : i32
    %c0_i32_1 = arith.constant 0 : i32
    return %c0_i32, %c0_i32_0 : i32, i32
  }
  func.func @transform_6(%arg0: i32) -> (i32, i32) {
    %c0_i32 = arith.constant 0 : i32
    %c0_i32_0 = arith.constant 0 : i32
    %c0_i32_1 = arith.constant 0 : i32
    return %c0_i32, %c0_i32_0 : i32, i32
  }
  func.func @transform_7(%arg0: i32) -> (i32, i32) {
    %c0_i32 = arith.constant 0 : i32
    %c0_i32_0 = arith.constant 0 : i32
    %c0_i32_1 = arith.constant 0 : i32
    return %c0_i32, %c0_i32_0 : i32, i32
  }
  func.func @transform_8(%arg0: i32) -> (i32, i32, i32) {
    %c0_i32 = arith.constant 0 : i32
    %c0_i32_0 = arith.constant 0 : i32
    %c0_i32_1 = arith.constant 0 : i32
    return %arg0, %c0_i32, %c0_i32_0 : i32, i32, i32
  }
  func.func @transform_9(%arg0: i32) -> (i32, i32, i32) {
    %c0_i32 = arith.constant 0 : i32
    %c0_i32_0 = arith.constant 0 : i32
    %c0_i32_1 = arith.constant 0 : i32
    return %arg0, %c0_i32, %c0_i32_0 : i32, i32, i32
  }
}

</mosaic_0001>

<llo_original>
// kernel: pfe_forward.1
$region0: #{pfe_forward.1}
  #allocation0 [shape = 'u32[]', space=smem, size = 0x4, offset = 0x4, fixed_abs, tag = 'smem constant byte address 0x4 - core index']
  #allocation1 [shape = 'u32[144,128]{1,0:T(1,128)}', space=vmem, size = 0x12000, scoped, tag = 'internal scratch']
  %s0 = inlined_call_operand.vmem [shape: f32[2,192,46], index: 0, kind: input, shape index: {}]
  %s1 = inlined_call_operand.vmem [shape: f32[32,192], index: 1, kind: input, shape index: {}]
  %s2 = inlined_call_operand.vmem [shape: f32[46,32], index: 2, kind: input, shape index: {}]
  %s3 = inlined_call_operand.vmem [shape: f32[4,46,32], index: 3, kind: input, shape index: {}]
  %s4 = inlined_call_operand.vmem [shape: f32[32,48], index: 4, kind: input, shape index: {}]
  %s5 = inlined_call_operand.vmem [shape: f32[1,32], index: 5, kind: input, shape index: {}]
  %s6 = inlined_call_operand.vmem [shape: f32[32,1], index: 6, kind: input, shape index: {}]
  %s7 = inlined_call_operand.vmem [shape: f32[1,4], index: 7, kind: input, shape index: {}]
  %s8 = inlined_call_operand.hbm [shape: f32[2,32,32], index: 8, kind: output, shape index: {0}]
  %s9 = inlined_call_operand.vmem [shape: f32[2,1,1], index: 9, kind: output, shape index: {1}]
  %10 = xla_tuple %s8, %s9
  %s11 = sld [smem:[#allocation0]]
  $region77: #{pfe_forward.1} parent=0
    _
  %s13 = ssub.s32 1, %s11
  %s14 = scalar_select 0, %s13, %s11
  $region1: #{pfe_forward.1} parent=0
    #allocation2 [shape = 'u8[512]{0}', space=smem, size = 0x200, scoped, tag = 'input window, operand 7, single buffered']
    #allocation3 [shape = 's32[2]{0}', space=sflag, size = 0x8, scoped, tag = 'scoped memory for pfe_forward.1']
    #allocation4 [shape = 's32[2]{0}', space=sflag, size = 0x8, scoped, tag = 'scoped memory for pfe_forward.1']
    #allocation5 [shape = 'u8[32768]{0}', space=vmem, size = 0x8000, scoped, tag = 'output window, operand 0']
    %15 = vsyncpa [#allocation4], 0
    %16 = vsyncpa [#allocation3], 0
    %s17 = scalar_lea.sflag [#allocation3], 1
    %18 = vsyncpa %s17, 0
    loop: start=0, step=1, limit=4
    $region2: #{pfe_forward.1} parent=1 // loop_pre_header
      _
    $region3: #{pfe_forward.1} parent=1 // loop_header
      %s20 = sphi 0, %s24
      %p21 = scmp.ge.s32.totalorder %s20, 4
      %s30 = sphi 0, %s32
      %s33 = sphi 0, %s30
      %s34 = sphi 0, %s33
      %s50 = sphi 0, %s34
      %s54 = sphi 0, %s54
      %s56 = sphi 0, %s54
      %s57 = sphi 0, %s56
      %s71 = sphi 0, %s57
      %s75 = sphi 0, %s75
      %s77 = sphi 0, %s75
      %s78 = sphi 0, %s77
      %s92 = sphi 0, %s78
      %s96 = sphi 0, %s96
      %s98 = sphi 0, %s96
      %s99 = sphi 0, %s98
      %s113 = sphi 0, %s99
      %s117 = sphi 0, %s117
      %s119 = sphi 0, %s117
      %s120 = sphi 0, %s119
      %s134 = sphi 0, %s120
      %s138 = sphi 0, %s138
      %s140 = sphi 0, %s138
      %s141 = sphi 0, %s140
      %s155 = sphi 0, %s141
      %s159 = sphi 0, %s159
      %s161 = sphi 0, %s159
      %s162 = sphi 0, %s161
      %s176 = sphi 0, %s162
      %s180 = sphi 0, %s180
      %s182 = sphi 0, %s180
      %s183 = sphi 0, %s182
      %s197 = sphi 0, %s183
      %s203 = sphi 0, %s205
      %s206 = sphi 0, %s203
      %s207 = sphi 0, %s206
      %s223 = sphi 0, %s207
      %s229 = sphi 0, %s231
      %s232 = sphi 0, %s229
      %s233 = sphi 0, %s232
      %s249 = sphi 0, %s233
    $region4: #{pfe_forward.1} parent=1 // loop_header_branch
      %23 = sbr.rel (%p21) target = $region8
    $region5: #{pfe_forward.1} parent=1 // loop_body
      %s25 = ssub.s32 %s20, 1
      %s26 = ssub.s32 %s20, 2
      %s27 = sadd.s32 %s20, 1
      %s28 = ssub.s32 %s20, %s27
      %p29 = scmp.eq.s32.totalorder %s28, 0
      %s31 = sadd.s32 %s30, 1
      %s32 = scalar_select %p29, %s30, %s31
      %p35 = pneg %p29
      %p36 = scmp.eq.s32.totalorder %s20, 1
      %p37 = por %p35, %p36
      %p38 = scmp.ne.s32.totalorder %s30, %s33
      %p39 = scmp.eq.s32.totalorder %s20, 0
      %p40 = por %p38, %p39
      %p41 = scmp.ne.s32.totalorder %s30, %s33
      %p42 = scmp.eq.s32.totalorder %s25, 1
      %p43 = por %p41, %p42
      %p44 = scmp.ne.s32.totalorder %s33, %s34
      %p45 = scmp.eq.s32.totalorder %s25, 0
      %p46 = por %p44, %p45
      %p47 = scmp.ne.s32.totalorder %s33, %s34
      %p48 = scmp.eq.s32.totalorder %s26, 1
      %p49 = por %p47, %p48
      %p51 = scmp.ne.s32.totalorder %s34, %s50
      %p52 = scmp.eq.s32.totalorder %s26, 0
      %p53 = por %p51, %p52
      %s55 = sadd.s32 %s54, 1
      %p58 = scmp.eq.s32.totalorder %s20, 1
      %p59 = scmp.ne.s32.totalorder %s54, %s56
      %p60 = scmp.eq.s32.totalorder %s20, 0
      %p61 = por %p59, %p60
      %p62 = scmp.ne.s32.totalorder %s54, %s56
      %p63 = scmp.eq.s32.totalorder %s25, 1
      %p64 = por %p62, %p63
      %p65 = scmp.ne.s32.totalorder %s56, %s57
      %p66 = scmp.eq.s32.totalorder %s25, 0
      %p67 = por %p65, %p66
      %p68 = scmp.ne.s32.totalorder %s56, %s57
      %p69 = scmp.eq.s32.totalorder %s26, 1
      %p70 = por %p68, %p69
      %p72 = scmp.ne.s32.totalorder %s57, %s71
      %p73 = scmp.eq.s32.totalorder %s26, 0
      %p74 = por %p72, %p73
      %s76 = sadd.s32 %s75, 1
      %p79 = scmp.eq.s32.totalorder %s20, 1
      %p80 = scmp.ne.s32.totalorder %s75, %s77
      %p81 = scmp.eq.s32.totalorder %s20, 0
      %p82 = por %p80, %p81
      %p83 = scmp.ne.s32.totalorder %s75, %s77
      %p84 = scmp.eq.s32.totalorder %s25, 1
      %p85 = por %p83, %p84
      %p86 = scmp.ne.s32.totalorder %s77, %s78
      %p87 = scmp.eq.s32.totalorder %s25, 0
      %p88 = por %p86, %p87
      %p89 = scmp.ne.s32.totalorder %s77, %s78
      %p90 = scmp.eq.s32.totalorder %s26, 1
      %p91 = por %p89, %p90
      %p93 = scmp.ne.s32.totalorder %s78, %s92
      %p94 = scmp.eq.s32.totalorder %s26, 0
      %p95 = por %p93, %p94
      %s97 = sadd.s32 %s96, 1
      %p100 = scmp.eq.s32.totalorder %s20, 1
      %p101 = scmp.ne.s32.totalorder %s96, %s98
      %p102 = scmp.eq.s32.totalorder %s20, 0
      %p103 = por %p101, %p102
      %p104 = scmp.ne.s32.totalorder %s96, %s98
      %p105 = scmp.eq.s32.totalorder %s25, 1
      %p106 = por %p104, %p105
      %p107 = scmp.ne.s32.totalorder %s98, %s99
      %p108 = scmp.eq.s32.totalorder %s25, 0
      %p109 = por %p107, %p108
      %p110 = scmp.ne.s32.totalorder %s98, %s99
      %p111 = scmp.eq.s32.totalorder %s26, 1
      %p112 = por %p110, %p111
      %p114 = scmp.ne.s32.totalorder %s99, %s113
      %p115 = scmp.eq.s32.totalorder %s26, 0
      %p116 = por %p114, %p115
      %s118 = sadd.s32 %s117, 1
      %p121 = scmp.eq.s32.totalorder %s20, 1
      %p122 = scmp.ne.s32.totalorder %s117, %s119
      %p123 = scmp.eq.s32.totalorder %s20, 0
      %p124 = por %p122, %p123
      %p125 = scmp.ne.s32.totalorder %s117, %s119
      %p126 = scmp.eq.s32.totalorder %s25, 1
      %p127 = por %p125, %p126
      %p128 = scmp.ne.s32.totalorder %s119, %s120
      %p129 = scmp.eq.s32.totalorder %s25, 0
      %p130 = por %p128, %p129
      %p131 = scmp.ne.s32.totalorder %s119, %s120
      %p132 = scmp.eq.s32.totalorder %s26, 1
      %p133 = por %p131, %p132
      %p135 = scmp.ne.s32.totalorder %s120, %s134
      %p136 = scmp.eq.s32.totalorder %s26, 0
      %p137 = por %p135, %p136
      %s139 = sadd.s32 %s138, 1
      %p142 = scmp.eq.s32.totalorder %s20, 1
      %p143 = scmp.ne.s32.totalorder %s138, %s140
      %p144 = scmp.eq.s32.totalorder %s20, 0
      %p145 = por %p143, %p144
      %p146 = scmp.ne.s32.totalorder %s138, %s140
      %p147 = scmp.eq.s32.totalorder %s25, 1
      %p148 = por %p146, %p147
      %p149 = scmp.ne.s32.totalorder %s140, %s141
      %p150 = scmp.eq.s32.totalorder %s25, 0
      %p151 = por %p149, %p150
      %p152 = scmp.ne.s32.totalorder %s140, %s141
      %p153 = scmp.eq.s32.totalorder %s26, 1
      %p154 = por %p152, %p153
      %p156 = scmp.ne.s32.totalorder %s141, %s155
      %p157 = scmp.eq.s32.totalorder %s26, 0
      %p158 = por %p156, %p157
      %s160 = sadd.s32 %s159, 1
      %p163 = scmp.eq.s32.totalorder %s20, 1
      %p164 = scmp.ne.s32.totalorder %s159, %s161
      %p165 = scmp.eq.s32.totalorder %s20, 0
      %p166 = por %p164, %p165
      %p167 = scmp.ne.s32.totalorder %s159, %s161
      %p168 = scmp.eq.s32.totalorder %s25, 1
      %p169 = por %p167, %p168
      %p170 = scmp.ne.s32.totalorder %s161, %s162
      %p171 = scmp.eq.s32.totalorder %s25, 0
      %p172 = por %p170, %p171
      %p173 = scmp.ne.s32.totalorder %s161, %s162
      %p174 = scmp.eq.s32.totalorder %s26, 1
      %p175 = por %p173, %p174
      %p177 = scmp.ne.s32.totalorder %s162, %s176
      %p178 = scmp.eq.s32.totalorder %s26, 0
      %p179 = por %p177, %p178
      %s181 = sadd.s32 %s180, 1
      %p184 = scmp.eq.s32.totalorder %s20, 1
      %p185 = scmp.ne.s32.totalorder %s180, %s182
      %p186 = scmp.eq.s32.totalorder %s20, 0
      %p187 = por %p185, %p186
      %p188 = scmp.ne.s32.totalorder %s180, %s182
      %p189 = scmp.eq.s32.totalorder %s25, 1
      %p190 = por %p188, %p189
      %p191 = scmp.ne.s32.totalorder %s182, %s183
      %p192 = scmp.eq.s32.totalorder %s25, 0
      %p193 = por %p191, %p192
      %p194 = scmp.ne.s32.totalorder %s182, %s183
      %p195 = scmp.eq.s32.totalorder %s26, 1
      %p196 = por %p194, %p195
      %p198 = scmp.ne.s32.totalorder %s183, %s197
      %p199 = scmp.eq.s32.totalorder %s26, 0
      %p200 = por %p198, %p199
      %s201 = ssub.s32 %s20, %s27
      %p202 = scmp.eq.s32.totalorder %s201, 0
      %s204 = sadd.s32 %s203, 1
      %s205 = scalar_select %p202, %s203, %s204
      %p208 = pneg %p202
      %p209 = scmp.eq.s32.totalorder %s20, 1
      %p210 = por %p208, %p209
      %p211 = scmp.ne.s32.totalorder %s203, %s206
      %p212 = scmp.eq.s32.totalorder %s20, 0
      %p213 = por %p211, %p212
      %p214 = scmp.ne.s32.totalorder %s203, %s206
      %p215 = scmp.eq.s32.totalorder %s25, 1
      %p216 = por %p214, %p215
      %p217 = scmp.ne.s32.totalorder %s206, %s207
      %p218 = scmp.eq.s32.totalorder %s25, 0
      %p219 = por %p217, %p218
      %p220 = scmp.ne.s32.totalorder %s206, %s207
      %p221 = scmp.eq.s32.totalorder %s26, 1
      %p222 = por %p220, %p221
      %p224 = scmp.ne.s32.totalorder %s207, %s223
      %p225 = scmp.eq.s32.totalorder %s26, 0
      %p226 = por %p224, %p225
      %s227 = ssub.s32 %s20, %s27
      %p228 = scmp.eq.s32.totalorder %s227, 0
      %s230 = sadd.s32 %s229, 1
      %s231 = scalar_select %p228, %s229, %s230
      %p234 = pneg %p228
      %p235 = scmp.eq.s32.totalorder %s20, 1
      %p236 = por %p234, %p235
      %p237 = scmp.ne.s32.totalorder %s229, %s232
      %p238 = scmp.eq.s32.totalorder %s20, 0
      %p239 = por %p237, %p238
      %p240 = scmp.ne.s32.totalorder %s229, %s232
      %p241 = scmp.eq.s32.totalorder %s25, 1
      %p242 = por %p240, %p241
      %p243 = scmp.ne.s32.totalorder %s232, %s233
      %p244 = scmp.eq.s32.totalorder %s25, 0
      %p245 = por %p243, %p244
      %p246 = scmp.ne.s32.totalorder %s232, %s233
      %p247 = scmp.eq.s32.totalorder %s26, 1
      %p248 = por %p246, %p247
      %p250 = scmp.ne.s32.totalorder %s233, %s249
      %p251 = scmp.eq.s32.totalorder %s26, 0
      %p252 = por %p250, %p251
      %p253 = scmp.le.s32.totalorder 1, %s20
      %p254 = scmp.lt.s32.totalorder %s20, 3
      %p255 = pnand %p253, %p254
      %p256 = pneg %p255
      // Predicated region
      $region9: #{pfe_forward.1} parent=5 // pred_check
        _
      $region10: #{pfe_forward.1} parent=5 // pred_check_branch
        %258 = sbr.rel (%p255) target = $region12
      $region11: #{pfe_forward.1} parent=5 // pred_region
        %s259 = ssub.s32 %s20, 1
        // Predicated region
        $region13: #{pfe_forward.1} parent=11 // pred_check
          %p260 = pneg %p67
        $region14: #{pfe_forward.1} parent=11 // pred_check_branch
          %262 = sbr.rel (%p260) target = $region16
        $region15: #{pfe_forward.1} parent=11 // pred_region
          _
        $region16: #{pfe_forward.1} parent=11 // pred_fallthru
          _
        // Predicated region
        $region17: #{pfe_forward.1} parent=11 // pred_check
          %p263 = pneg %p88
        $region18: #{pfe_forward.1} parent=11 // pred_check_branch
          %265 = sbr.rel (%p263) target = $region20
        $region19: #{pfe_forward.1} parent=11 // pred_region
          _
        $region20: #{pfe_forward.1} parent=11 // pred_fallthru
          _
        // Predicated region
        $region21: #{pfe_forward.1} parent=11 // pred_check
          %p266 = pneg %p109
        $region22: #{pfe_forward.1} parent=11 // pred_check_branch
          %268 = sbr.rel (%p266) target = $region24
        $region23: #{pfe_forward.1} parent=11 // pred_region
          _
        $region24: #{pfe_forward.1} parent=11 // pred_fallthru
          _
        // Predicated region
        $region25: #{pfe_forward.1} parent=11 // pred_check
          %p269 = pneg %p130
        $region26: #{pfe_forward.1} parent=11 // pred_check_branch
          %271 = sbr.rel (%p269) target = $region28
        $region27: #{pfe_forward.1} parent=11 // pred_region
          _
        $region28: #{pfe_forward.1} parent=11 // pred_fallthru
          _
        // Predicated region
        $region29: #{pfe_forward.1} parent=11 // pred_check
          %p272 = pneg %p151
        $region30: #{pfe_forward.1} parent=11 // pred_check_branch
          %274 = sbr.rel (%p272) target = $region32
        $region31: #{pfe_forward.1} parent=11 // pred_region
          _
        $region32: #{pfe_forward.1} parent=11 // pred_fallthru
          _
        // Predicated region
        $region33: #{pfe_forward.1} parent=11 // pred_check
          %p275 = pneg %p172
        $region34: #{pfe_forward.1} parent=11 // pred_check_branch
          %277 = sbr.rel (%p275) target = $region36
        $region35: #{pfe_forward.1} parent=11 // pred_region
          _
        $region36: #{pfe_forward.1} parent=11 // pred_fallthru
          _
        // Predicated region
        $region37: #{pfe_forward.1} parent=11 // pred_check
          %p278 = pneg %p193
        $region38: #{pfe_forward.1} parent=11 // pred_check_branch
          %280 = sbr.rel (%p278) target = $region40
        $region39: #{pfe_forward.1} parent=11 // pred_region
          %s282 = ssub.s32 16, 16
          %283 = vsyncadd [#allocation4], %s282
          %s285 = sshll.u32 %s7, 4
          %s286 = int_to_ptr.vmem [resolvable:$true] %s285
          %288 = dma.vmem_to_smem %s286, 16, [#allocation2], [#allocation4]
        $region40: #{pfe_forward.1} parent=11 // pred_fallthru
          _
      $region12: #{pfe_forward.1} parent=5 // pred_fallthru
        _
      %p289 = scmp.lt.s32.totalorder %s20, 2
      // Predicated region
      $region41: #{pfe_forward.1} parent=5 // pred_check
        %p290 = pneg %p289
      $region42: #{pfe_forward.1} parent=5 // pred_check_branch
        %292 = sbr.rel (%p290) target = $region44
      $region43: #{pfe_forward.1} parent=5 // pred_region
        // Predicated region
        $region45: #{pfe_forward.1} parent=43 // pred_check
          %p293 = pneg %p40
        $region46: #{pfe_forward.1} parent=43 // pred_check_branch
          %295 = sbr.rel (%p293) target = $region48
        $region47: #{pfe_forward.1} parent=43 // pred_region
          %p296 = scmp.lt.s32.totalorder %s20, 1
          %s297 = scalar_select %p296, %s20, 1
          %s298 = smul.addr %s297, 24
          %s299 = smul.addr %s298, 8
          %s300 = scalar_lea.vmem %s0, %s299
        $region48: #{pfe_forward.1} parent=43 // pred_fallthru
          _
      $region44: #{pfe_forward.1} parent=5 // pred_fallthru
        _
      %p301 = scmp.le.s32.totalorder 1, %s20
      %p302 = scmp.lt.s32.totalorder %s20, 3
      %p303 = pnand %p301, %p302
      %p304 = pneg %p303
      // Predicated region
      $region49: #{pfe_forward.1} parent=5 // pred_check
        _
      $region50: #{pfe_forward.1} parent=5 // pred_check_branch
        %306 = sbr.rel (%p303) target = $region52
      $region51: #{pfe_forward.1} parent=5 // pred_region
        %s307 = ssub.s32 %s20, 1
        // Predicated region
        $region53: #{pfe_forward.1} parent=51 // pred_check
          %p308 = pneg %p193
        $region54: #{pfe_forward.1} parent=51 // pred_check_branch
          %310 = sbr.rel (%p308) target = $region56
        $region55: #{pfe_forward.1} parent=51 // pred_region
          %311 = dma.done [#allocation4], 16
        $region56: #{pfe_forward.1} parent=51 // pred_fallthru
          _
        %312 = sfence
        %p313 = scmp.lt.s32.totalorder %s25, 1
        %s314 = scalar_select %p313, %s25, 1
        %s315 = smul.addr %s314, 24
        %s316 = smul.addr %s315, 8
        %s317 = scalar_lea.vmem %s0, %s316
        %p318 = pneg %p46
        %p319 = pneg %p43
        %p320 = pneg %p67
        %p321 = pneg %p64
        %p322 = pneg %p88
        %p323 = pneg %p85
        %p324 = pneg %p109
        %p325 = pneg %p106
        %p326 = pneg %p130
        %p327 = pneg %p127
        %p328 = pneg %p151
        %p329 = pneg %p148
        %p330 = pneg %p172
        %p331 = pneg %p169
        %p332 = pneg %p193
        %p333 = pneg %p190
        %p334 = pneg %p219
        %p335 = pneg %p216
        %s336 = sand.u32 %s206, 1
        %s337 = scalar_lea.sflag [#allocation3], %s336
        %s338 = sand.u32 %s206, 1
        %s339 = smul.addr %s338, 32
        %s340 = scalar_lea.vmem [#allocation5], %s339
        %p341 = pneg %p245
        %p342 = pneg %p242
        %p343 = scmp.lt.s32.totalorder %s25, 1
        %s344 = scalar_select %p343, %s25, 1
        %s345 = scalar_lea.vmem %s9, %s344
        %p346 = scmp.lt.s32.totalorder %s25, 1
        %s347 = scalar_select %p346, %s25, 1
        %s348 = smul.addr %s347, 24
        %s349 = smul.addr %s348, 8
        %s350 = scalar_lea.vmem %s0, %s349
        %p351 = scmp.lt.s32.totalorder %s25, 1
        %s352 = scalar_select %p351, %s25, 1
        %s353 = scalar_lea.vmem %s9, %s352
        %v354 = vld [vmem:[%s350] sm:$0xff]
        %v355 = vld [vmem:[%s350 + $0x8] sm:$0xff]
        %v356 = vld [vmem:[%s350 + $0x10] sm:$0xff]
        %v357 = vld [vmem:[%s350 + $0x18] sm:$0xff]
        %v358 = vld [vmem:[%s350 + $0x20] sm:$0xff]
        %v359 = vld [vmem:[%s350 + $0x28] sm:$0xff]
        %v360 = vld [vmem:[%s350 + $0x30] sm:$0xff]
        %v361 = vld [vmem:[%s350 + $0x38] sm:$0xff]
        %v362 = vld [vmem:[%s350 + $0x40] sm:$0xff]
        %v363 = vld [vmem:[%s350 + $0x48] sm:$0xff]
        %v364 = vld [vmem:[%s350 + $0x50] sm:$0xff]
        %v365 = vld [vmem:[%s350 + $0x58] sm:$0xff]
        %v366 = vld [vmem:[%s350 + $0x60] sm:$0xff]
        %v367 = vld [vmem:[%s350 + $0x68] sm:$0xff]
        %v368 = vld [vmem:[%s350 + $0x70] sm:$0xff]
        %v369 = vld [vmem:[%s350 + $0x78] sm:$0xff]
        %v370 = vld [vmem:[%s350 + $0x80] sm:$0xff]
        %v371 = vld [vmem:[%s350 + $0x88] sm:$0xff]
        %v372 = vld [vmem:[%s350 + $0x90] sm:$0xff]
        %v373 = vld [vmem:[%s350 + $0x98] sm:$0xff]
        %v374 = vld [vmem:[%s350 + $0xa0] sm:$0xff]
        %v375 = vld [vmem:[%s350 + $0xa8] sm:$0xff]
        %v376 = vld [vmem:[%s350 + $0xb0] sm:$0xff]
        %v377 = vld [vmem:[%s350 + $0xb8] sm:$0xff]
        %v378 = vld [vmem:[%s1] sm:$0xff]
        %v379 = vld [vmem:[%s1 + $0x8] sm:$0xff]
        %v380 = vld [vmem:[%s1 + $0x10] sm:$0xff]
        %v381 = vld [vmem:[%s1 + $0x18] sm:$0xff]
        %v382 = vld [vmem:[%s1 + $0x20] sm:$0xff]
        %v383 = vld [vmem:[%s1 + $0x28] sm:$0xff]
        %v384 = vld [vmem:[%s1 + $0x30] sm:$0xff]
        %v385 = vld [vmem:[%s1 + $0x38] sm:$0xff]
        %v386 = vlaneseq
        %v387 = vand.u32 %v386, 127
        %vm388 = vcmp.lt.s32.totalorder %v387, 0
        %v389 = vsub.s32 0, %v387
        %v390 = vsel %vm388, %v389, %v387
        %v391 = vmul.u32.u64.compose %v390, 2987803337
        %v392 = vextract.low.u32 %v391
        %v393 = vextract.high.u32 %v391
        %v394 = vshrl.u32 %v393, 5
        %v395 = vmul.u32 %v394, 46
        %v396 = vsub.s32 %v390, %v395
        %v397 = vsub.s32 0, %v396
        %v398 = vsel %vm388, %v397, %v396
        %vm399 = vcmp.ne.s32.totalorder %v398, 0
        %vm400 = vcmp.lt.s32.totalorder %v398, 0
        %vm401 = vmand %vm400, %vm399
        %v402 = vadd.s32 %v398, 46
        %v403 = vsel %vm401, %v402, %v398
        %vm404 = vcmp.ge.s32.totalorder %v403, 7
        %vm405 = vcmp.lt.s32.totalorder %v403, 39
        %vm406 = vmand %vm404, %vm405
        %s407 = sld [smem:[#allocation2]]
        %v408 = vstv %s407
        %vm409 = vcmask 523264
        %v411 = vsel %vm409, %v379, 0
        %v414 = vsel %vm409, %v381, 0
        %v417 = vsel %vm409, %v383, 0
        %v420 = vsel %vm409, %v385, 0
        %422 = vmatprep.subr.mxu0 0.0
        %423 = vmatpush1.msra.mxu0 %v369
        %424 = vmatprep.subr.mxu0 0.0
        %425 = vmatpush1.msra.mxu0 %v368
        %426 = vmatprep.subr.mxu0 0.0
        %427 = vmatpush1.msra.mxu0 %v367
        %428 = vmatprep.subr.mxu0 0.0
        %429 = vmatpush1.msra.mxu0 %v366
        %430 = vmatprep.subr.mxu0 0.0
        %431 = vmatpush1.msra.mxu0 %v365
        %432 = vmatprep.subr.mxu0 0.0
        %433 = vmatpush1.msra.mxu0 %v364
        %434 = vmatprep.subr.mxu0 0.0
        %435 = vmatpush1.msra.mxu0 %v363
        %436 = vmatprep.subr.mxu0 0.0
        %437 = vmatpush1.msra.mxu0 %v362
        %438 = vmatprep.subr.mxu0 0.0
        %439 = vmatpush1.msra.mxu0 %v361
        %440 = vmatprep.subr.mxu0 0.0
        %441 = vmatpush1.msra.mxu0 %v360
        %442 = vmatprep.subr.mxu0 0.0
        %443 = vmatpush1.msra.mxu0 %v359
        %444 = vmatprep.subr.mxu0 0.0
        %445 = vmatpush1.msra.mxu0 %v358
        %446 = vmatprep.subr.mxu0 0.0
        %447 = vmatpush1.msra.mxu0 %v357
        %448 = vmatprep.subr.mxu0 0.0
        %449 = vmatpush1.msra.mxu0 %v356
        %450 = vmatprep.subr.mxu0 0.0
        %451 = vmatpush1.msra.mxu0 %v355
        %452 = vmatprep.subr.mxu0 0.0
        %453 = vmatpush1.msra.mxu0 %v354
        %454 = vmatprep.subr.mxu0 0.0
        %455 = vmatpush2.msra.mxu0 0.0
        %456 = vmatprep.subr.mxu0 0.0
        %457 = vmatpush2.msra.mxu0 0.0
        %458 = vmatprep.subr.mxu0 0.0
        %459 = vmatpush2.msra.mxu0 0.0
        %460 = vmatprep.subr.mxu0 0.0
        %461 = vmatpush2.msra.mxu0 0.0
        %462 = vmatprep.subr.mxu0 0.0
        %463 = vmatpush2.msra.mxu0 0.0
        %464 = vmatprep.subr.mxu0 0.0
        %465 = vmatpush2.msra.mxu0 0.0
        %466 = vmatprep.subr.mxu0 0.0
        %467 = vmatpush2.msra.mxu0 0.0
        %468 = vmatprep.subr.mxu0 0.0
        %469 = vmatpush2.msra.mxu0 0.0
        %470 = vmatprep.subr.mxu0 0.0
        %471 = vmatpush2.msra.mxu0 %v377
        %472 = vmatprep.subr.mxu0 0.0
        %473 = vmatpush2.msra.mxu0 %v376
        %474 = vmatprep.subr.mxu0 0.0
        %475 = vmatpush2.msra.mxu0 %v375
        %476 = vmatprep.subr.mxu0 0.0
        %477 = vmatpush2.msra.mxu0 %v374
        %478 = vmatprep.subr.mxu0 0.0
        %479 = vmatpush2.msra.mxu0 %v373
        %480 = vmatprep.subr.mxu0 0.0
        %481 = vmatpush2.msra.mxu0 %v372
        %482 = vmatprep.subr.mxu0 0.0
        %483 = vmatpush2.msra.mxu0 %v371
        %484 = vmatprep.subr.mxu0 0.0
        %485 = vmatpush2.msra.mxu0 %v370
        %486 = vmatprep.mubr.f32.mxu0 %v411
        %487 = vmatmul.mubr.f32.gmra.mxu0 %v378
        %v488 = vpop.f32.mrf.mxu0
        %v489 = vadd.f32 %v408, %v488
        %v490 = vpop.f32.mrf.mxu0
        %491 = vmatprep.mubr.f32.mxu0 %v414
        %492 = vmatmul.mubr.f32.gmra.mxu0 %v380
        %v493 = vpop.f32.mrf.mxu0
        %v494 = vadd.f32 %v408, %v493
        %v495 = vpop.f32.mrf.mxu0
        %496 = vmatprep.mubr.f32.mxu0 %v417
        %497 = vmatmul.mubr.f32.gmra.mxu0 %v382
        %v498 = vpop.f32.mrf.mxu0
        %v499 = vadd.f32 %v408, %v498
        %v500 = vpop.f32.mrf.mxu0
        %501 = vmatprep.mubr.f32.mxu0 %v420
        %502 = vmatmul.mubr.f32.gmra.mxu0 %v384
        %v503 = vpop.f32.mrf.mxu0
        %v504 = vadd.f32 %v408, %v503
        %v505 = vpop.f32.mrf.mxu0
        %506 = vdwg.mxu0
        %v507 = vsel %vm406, 1, 0
        %vm508 = vcmp.eq.s32.totalorder %v507, 1
        %v509 = vsel %vm508, %v489, 0.0
        %v510 = vsel %vm508, %v494, 0.0
        %v511 = vsel %vm508, %v499, 0.0
        %v512 = vsel %vm508, %v504, 0.0
        %v513 = vld [vmem:[%s2] sm:$0xff]
        %v514 = vld [vmem:[%s2 + $0x8] sm:$0xff]
        %v515 = vld [vmem:[%s2 + $0x10] sm:$0xff]
        %v516 = vld [vmem:[%s2 + $0x18] sm:$0xff]
        %v517 = vld [vmem:[%s2 + $0x20] sm:$0xff]
        %v518 = vld [vmem:[%s2 + $0x28] sm:$0x3f]
        %s519 = sld [smem:[#allocation2 + $0x1]]
        %v520 = vstv %s519
        %vm521 = vcmask 375808
        %v523 = vsel %vm521, %v509, 0
        %v526 = vsel %vm521, %v510, 0
        %v529 = vsel %vm521, %v511, 0
        %v532 = vsel %vm521, %v512, 0
        %vm534 = vcmask 1045504
        %v536 = vsel %vm534, %v518, 0
        %538 = vmatprep.subr.mxu0 0.0
        %539 = vmatpush1.msra.mxu0 0.0
        %540 = vmatprep.subr.mxu0 0.0
        %541 = vmatpush1.msra.mxu0 0.0
        %542 = vmatprep.subr.mxu0 0.0
        %543 = vmatpush1.msra.mxu0 0.0
        %544 = vmatprep.subr.mxu0 0.0
        %545 = vmatpush1.msra.mxu0 0.0
        %546 = vmatprep.subr.mxu0 0.0
        %547 = vmatpush1.msra.mxu0 0.0
        %548 = vmatprep.subr.mxu0 0.0
        %549 = vmatpush1.msra.mxu0 0.0
        %550 = vmatprep.subr.mxu0 0.0
        %551 = vmatpush1.msra.mxu0 0.0
        %552 = vmatprep.subr.mxu0 0.0
        %553 = vmatpush1.msra.mxu0 0.0
        %554 = vmatprep.subr.mxu0 0.0
        %555 = vmatpush1.msra.mxu0 0.0
        %556 = vmatprep.subr.mxu0 0.0
        %557 = vmatpush1.msra.mxu0 0.0
        %558 = vmatprep.subr.mxu0 0.0
        %559 = vmatpush1.msra.mxu0 %v536
        %560 = vmatprep.subr.mxu0 0.0
        %561 = vmatpush1.msra.mxu0 %v517
        %562 = vmatprep.subr.mxu0 0.0
        %563 = vmatpush1.msra.mxu0 %v516
        %564 = vmatprep.subr.mxu0 0.0
        %565 = vmatpush1.msra.mxu0 %v515
        %566 = vmatprep.subr.mxu0 0.0
        %567 = vmatpush1.msra.mxu0 %v514
        %568 = vmatprep.subr.mxu0 0.0
        %569 = vmatpush1.msra.mxu0 %v513
        %570 = vmatprep.subr.mxu0 0.0
        %571 = vmatpush2.msra.mxu0 0.0
        %572 = vmatprep.subr.mxu0 0.0
        %573 = vmatpush2.msra.mxu0 0.0
        %574 = vmatprep.subr.mxu0 0.0
        %575 = vmatpush2.msra.mxu0 0.0
        %576 = vmatprep.subr.mxu0 0.0
        %577 = vmatpush2.msra.mxu0 0.0
        %578 = vmatprep.subr.mxu0 0.0
        %579 = vmatpush2.msra.mxu0 0.0
        %580 = vmatprep.subr.mxu0 0.0
        %581 = vmatpush2.msra.mxu0 0.0
        %582 = vmatprep.subr.mxu0 0.0
        %583 = vmatpush2.msra.mxu0 0.0
        %584 = vmatprep.subr.mxu0 0.0
        %585 = vmatpush2.msra.mxu0 0.0
        %586 = vmatprep.subr.mxu0 0.0
        %587 = vmatpush2.msra.mxu0 0.0
        %588 = vmatprep.subr.mxu0 0.0
        %589 = vmatpush2.msra.mxu0 0.0
        %590 = vmatprep.subr.mxu0 0.0
        %591 = vmatpush2.msra.mxu0 0.0
        %592 = vmatprep.subr.mxu0 0.0
        %593 = vmatpush2.msra.mxu0 0.0
        %594 = vmatprep.subr.mxu0 0.0
        %595 = vmatpush2.msra.mxu0 0.0
        %596 = vmatprep.subr.mxu0 0.0
        %597 = vmatpush2.msra.mxu0 0.0
        %598 = vmatprep.subr.mxu0 0.0
        %599 = vmatpush2.msra.mxu0 0.0
        %600 = vmatprep.subr.mxu0 0.0
        %601 = vmatpush2.msra.mxu0 0.0
        %602 = vmatprep.mubr.f32.mxu0 0.0
        %603 = vmatmul.mubr.f32.gmra.mxu0 %v523
        %v604 = vpop.f32.mrf.mxu0
        %v605 = vadd.f32 %v520, %v604
        %v606 = vpop.f32.mrf.mxu0
        %607 = vmatprep.mubr.f32.mxu0 0.0
        %608 = vmatmul.mubr.f32.gmra.mxu0 %v526
        %v609 = vpop.f32.mrf.mxu0
        %v610 = vadd.f32 %v520, %v609
        %v611 = vpop.f32.mrf.mxu0
        %612 = vmatprep.mubr.f32.mxu0 0.0
        %613 = vmatmul.mubr.f32.gmra.mxu0 %v529
        %v614 = vpop.f32.mrf.mxu0
        %v615 = vadd.f32 %v520, %v614
        %v616 = vpop.f32.mrf.mxu0
        %617 = vmatprep.mubr.f32.mxu0 0.0
        %618 = vmatmul.mubr.f32.gmra.mxu0 %v532
        %v619 = vpop.f32.mrf.mxu0
        %v620 = vadd.f32 %v520, %v619
        %v621 = vpop.f32.mrf.mxu0
        %622 = vdwg.mxu0
        %v623 = vld [vmem:[%s3] sm:$0xff]
        %v624 = vld [vmem:[%s3 + $0x8] sm:$0xff]
        %v625 = vld [vmem:[%s3 + $0x10] sm:$0xff]
        %v626 = vld [vmem:[%s3 + $0x18] sm:$0xff]
        %v627 = vld [vmem:[%s3 + $0x20] sm:$0xff]
        %v628 = vld [vmem:[%s3 + $0x28] sm:$0x3f]
        %s629 = scalar_lea.vmem %s3, 48
        %v630 = vld [vmem:[%s629] sm:$0xff]
        %v631 = vld [vmem:[%s629 + $0x8] sm:$0xff]
        %v632 = vld [vmem:[%s629 + $0x10] sm:$0xff]
        %v633 = vld [vmem:[%s629 + $0x18] sm:$0xff]
        %v634 = vld [vmem:[%s629 + $0x20] sm:$0xff]
        %v635 = vld [vmem:[%s629 + $0x28] sm:$0x3f]
        %v637 = vsel %vm521, %v360, 0
        %v640 = vsel %vm521, %v361, 0
        %v643 = vsel %vm521, %v362, 0
        %v646 = vsel %vm521, %v363, 0
        %v649 = vsel %vm521, %v364, 0
        %v652 = vsel %vm521, %v365, 0
        %v655 = vsel %vm534, %v635, 0
        %657 = vmatprep.subr.mxu0 0.0
        %658 = vmatpush1.msra.mxu0 0.0
        %659 = vmatprep.subr.mxu0 0.0
        %660 = vmatpush1.msra.mxu0 0.0
        %661 = vmatprep.subr.mxu0 0.0
        %662 = vmatpush1.msra.mxu0 0.0
        %663 = vmatprep.subr.mxu0 0.0
        %664 = vmatpush1.msra.mxu0 0.0
        %665 = vmatprep.subr.mxu0 0.0
        %666 = vmatpush1.msra.mxu0 0.0
        %667 = vmatprep.subr.mxu0 0.0
        %668 = vmatpush1.msra.mxu0 0.0
        %669 = vmatprep.subr.mxu0 0.0
        %670 = vmatpush1.msra.mxu0 0.0
        %671 = vmatprep.subr.mxu0 0.0
        %672 = vmatpush1.msra.mxu0 0.0
        %673 = vmatprep.subr.mxu0 0.0
        %674 = vmatpush1.msra.mxu0 0.0
        %675 = vmatprep.subr.mxu0 0.0
        %676 = vmatpush1.msra.mxu0 0.0
        %677 = vmatprep.subr.mxu0 0.0
        %678 = vmatpush1.msra.mxu0 %v655
        %679 = vmatprep.subr.mxu0 0.0
        %680 = vmatpush1.msra.mxu0 %v634
        %681 = vmatprep.subr.mxu0 0.0
        %682 = vmatpush1.msra.mxu0 %v633
        %683 = vmatprep.subr.mxu0 0.0
        %684 = vmatpush1.msra.mxu0 %v632
        %685 = vmatprep.subr.mxu0 0.0
        %686 = vmatpush1.msra.mxu0 %v631
        %687 = vmatprep.subr.mxu0 0.0
        %688 = vmatpush1.msra.mxu0 %v630
        %689 = vmatprep.subr.mxu0 0.0
        %690 = vmatpush2.msra.mxu0 0.0
        %691 = vmatprep.subr.mxu0 0.0
        %692 = vmatpush2.msra.mxu0 0.0
        %693 = vmatprep.subr.mxu0 0.0
        %694 = vmatpush2.msra.mxu0 0.0
        %695 = vmatprep.subr.mxu0 0.0
        %696 = vmatpush2.msra.mxu0 0.0
        %697 = vmatprep.subr.mxu0 0.0
        %698 = vmatpush2.msra.mxu0 0.0
        %699 = vmatprep.subr.mxu0 0.0
        %700 = vmatpush2.msra.mxu0 0.0
        %701 = vmatprep.subr.mxu0 0.0
        %702 = vmatpush2.msra.mxu0 0.0
        %703 = vmatprep.subr.mxu0 0.0
        %704 = vmatpush2.msra.mxu0 0.0
        %705 = vmatprep.subr.mxu0 0.0
        %706 = vmatpush2.msra.mxu0 0.0
        %707 = vmatprep.subr.mxu0 0.0
        %708 = vmatpush2.msra.mxu0 0.0
        %709 = vmatprep.subr.mxu0 0.0
        %710 = vmatpush2.msra.mxu0 0.0
        %711 = vmatprep.subr.mxu0 0.0
        %712 = vmatpush2.msra.mxu0 0.0
        %713 = vmatprep.subr.mxu0 0.0
        %714 = vmatpush2.msra.mxu0 0.0
        %715 = vmatprep.subr.mxu0 0.0
        %716 = vmatpush2.msra.mxu0 0.0
        %717 = vmatprep.subr.mxu0 0.0
        %718 = vmatpush2.msra.mxu0 0.0
        %719 = vmatprep.subr.mxu0 0.0
        %720 = vmatpush2.msra.mxu0 0.0
        %721 = vmatprep.mubr.f32.mxu0 0.0
        %722 = vmatmul.mubr.f32.gmra.mxu0 %v637
        %v723 = vpop.f32.mrf.mxu0
        %v724 = vadd.f32 0.0, %v723
        %v725 = vpop.f32.mrf.mxu0
        %726 = vmatprep.mubr.f32.mxu0 0.0
        %727 = vmatmul.mubr.f32.gmra.mxu0 %v640
        %v728 = vpop.f32.mrf.mxu0
        %v729 = vadd.f32 0.0, %v728
        %v730 = vpop.f32.mrf.mxu0
        %731 = vmatprep.mubr.f32.mxu0 0.0
        %732 = vmatmul.mubr.f32.gmra.mxu0 %v643
        %v733 = vpop.f32.mrf.mxu0
        %v734 = vadd.f32 0.0, %v733
        %v735 = vpop.f32.mrf.mxu0
        %736 = vmatprep.mubr.f32.mxu0 0.0
        %737 = vmatmul.mubr.f32.gmra.mxu0 %v646
        %v738 = vpop.f32.mrf.mxu0
        %v739 = vadd.f32 0.0, %v738
        %v740 = vpop.f32.mrf.mxu0
        %741 = vmatprep.mubr.f32.mxu0 0.0
        %742 = vmatmul.mubr.f32.gmra.mxu0 %v649
        %v743 = vpop.f32.mrf.mxu0
        %v744 = vadd.f32 0.0, %v743
        %v745 = vpop.f32.mrf.mxu0
        %746 = vmatprep.mubr.f32.mxu0 0.0
        %747 = vmatmul.mubr.f32.gmra.mxu0 %v652
        %v748 = vpop.f32.mrf.mxu0
        %v749 = vadd.f32 0.0, %v748
        %v750 = vpop.f32.mrf.mxu0
        %751 = vdwg.mxu0
        %v753 = vsel %vm521, %v354, 0
        %v756 = vsel %vm521, %v355, 0
        %v759 = vsel %vm521, %v356, 0
        %v762 = vsel %vm521, %v357, 0
        %v765 = vsel %vm521, %v358, 0
        %v768 = vsel %vm521, %v359, 0
        %v771 = vsel %vm534, %v628, 0
        %773 = vmatprep.subr.mxu0 0.0
        %774 = vmatpush1.msra.mxu0 0.0
        %775 = vmatprep.subr.mxu0 0.0
        %776 = vmatpush1.msra.mxu0 0.0
        %777 = vmatprep.subr.mxu0 0.0
        %778 = vmatpush1.msra.mxu0 0.0
        %779 = vmatprep.subr.mxu0 0.0
        %780 = vmatpush1.msra.mxu0 0.0
        %781 = vmatprep.subr.mxu0 0.0
        %782 = vmatpush1.msra.mxu0 0.0
        %783 = vmatprep.subr.mxu0 0.0
        %784 = vmatpush1.msra.mxu0 0.0
        %785 = vmatprep.subr.mxu0 0.0
        %786 = vmatpush1.msra.mxu0 0.0
        %787 = vmatprep.subr.mxu0 0.0
        %788 = vmatpush1.msra.mxu0 0.0
        %789 = vmatprep.subr.mxu0 0.0
        %790 = vmatpush1.msra.mxu0 0.0
        %791 = vmatprep.subr.mxu0 0.0
        %792 = vmatpush1.msra.mxu0 0.0
        %793 = vmatprep.subr.mxu0 0.0
        %794 = vmatpush1.msra.mxu0 %v771
        %795 = vmatprep.subr.mxu0 0.0
        %796 = vmatpush1.msra.mxu0 %v627
        %797 = vmatprep.subr.mxu0 0.0
        %798 = vmatpush1.msra.mxu0 %v626
        %799 = vmatprep.subr.mxu0 0.0
        %800 = vmatpush1.msra.mxu0 %v625
        %801 = vmatprep.subr.mxu0 0.0
        %802 = vmatpush1.msra.mxu0 %v624
        %803 = vmatprep.subr.mxu0 0.0
        %804 = vmatpush1.msra.mxu0 %v623
        %805 = vmatprep.subr.mxu0 0.0
        %806 = vmatpush2.msra.mxu0 0.0
        %807 = vmatprep.subr.mxu0 0.0
        %808 = vmatpush2.msra.mxu0 0.0
        %809 = vmatprep.subr.mxu0 0.0
        %810 = vmatpush2.msra.mxu0 0.0
        %811 = vmatprep.subr.mxu0 0.0
        %812 = vmatpush2.msra.mxu0 0.0
        %813 = vmatprep.subr.mxu0 0.0
        %814 = vmatpush2.msra.mxu0 0.0
        %815 = vmatprep.subr.mxu0 0.0
        %816 = vmatpush2.msra.mxu0 0.0
        %817 = vmatprep.subr.mxu0 0.0
        %818 = vmatpush2.msra.mxu0 0.0
        %819 = vmatprep.subr.mxu0 0.0
        %820 = vmatpush2.msra.mxu0 0.0
        %821 = vmatprep.subr.mxu0 0.0
        %822 = vmatpush2.msra.mxu0 0.0
        %823 = vmatprep.subr.mxu0 0.0
        %824 = vmatpush2.msra.mxu0 0.0
        %825 = vmatprep.subr.mxu0 0.0
        %826 = vmatpush2.msra.mxu0 0.0
        %827 = vmatprep.subr.mxu0 0.0
        %828 = vmatpush2.msra.mxu0 0.0
        %829 = vmatprep.subr.mxu0 0.0
        %830 = vmatpush2.msra.mxu0 0.0
        %831 = vmatprep.subr.mxu0 0.0
        %832 = vmatpush2.msra.mxu0 0.0
        %833 = vmatprep.subr.mxu0 0.0
        %834 = vmatpush2.msra.mxu0 0.0
        %835 = vmatprep.subr.mxu0 0.0
        %836 = vmatpush2.msra.mxu0 0.0
        %837 = vmatprep.mubr.f32.mxu0 0.0
        %838 = vmatmul.mubr.f32.gmra.mxu0 %v753
        %v839 = vpop.f32.mrf.mxu0
        %v840 = vadd.f32 %v724, %v839
        %v841 = vpop.f32.mrf.mxu0
        %842 = vmatprep.mubr.f32.mxu0 0.0
        %843 = vmatmul.mubr.f32.gmra.mxu0 %v756
        %v844 = vpop.f32.mrf.mxu0
        %v845 = vadd.f32 %v729, %v844
        %v846 = vpop.f32.mrf.mxu0
        %847 = vmatprep.mubr.f32.mxu0 0.0
        %848 = vmatmul.mubr.f32.gmra.mxu0 %v759
        %v849 = vpop.f32.mrf.mxu0
        %v850 = vadd.f32 %v734, %v849
        %v851 = vpop.f32.mrf.mxu0
        %852 = vmatprep.mubr.f32.mxu0 0.0
        %853 = vmatmul.mubr.f32.gmra.mxu0 %v762
        %v854 = vpop.f32.mrf.mxu0
        %v855 = vadd.f32 %v739, %v854
        %v856 = vpop.f32.mrf.mxu0
        %857 = vmatprep.mubr.f32.mxu0 0.0
        %858 = vmatmul.mubr.f32.gmra.mxu0 %v765
        %v859 = vpop.f32.mrf.mxu0
        %v860 = vadd.f32 %v744, %v859
        %v861 = vpop.f32.mrf.mxu0
        %862 = vmatprep.mubr.f32.mxu0 0.0
        %863 = vmatmul.mubr.f32.gmra.mxu0 %v768
        %v864 = vpop.f32.mrf.mxu0
        %v865 = vadd.f32 %v749, %v864
        %v866 = vpop.f32.mrf.mxu0
        %867 = vdwg.mxu0
        %s868 = scalar_lea.vmem %s3, 96
        %v869 = vld [vmem:[%s868] sm:$0xff]
        %v870 = vld [vmem:[%s868 + $0x8] sm:$0xff]
        %v871 = vld [vmem:[%s868 + $0x10] sm:$0xff]
        %v872 = vld [vmem:[%s868 + $0x18] sm:$0xff]
        %v873 = vld [vmem:[%s868 + $0x20] sm:$0xff]
        %v874 = vld [vmem:[%s868 + $0x28] sm:$0x3f]
        %v876 = vsel %vm521, %v366, 0
        %v879 = vsel %vm521, %v367, 0
        %v882 = vsel %vm521, %v368, 0
        %v885 = vsel %vm521, %v369, 0
        %v888 = vsel %vm521, %v370, 0
        %v891 = vsel %vm521, %v371, 0
        %v894 = vsel %vm534, %v874, 0
        %896 = vmatprep.subr.mxu0 0.0
        %897 = vmatpush1.msra.mxu0 0.0
        %898 = vmatprep.subr.mxu0 0.0
        %899 = vmatpush1.msra.mxu0 0.0
        %900 = vmatprep.subr.mxu0 0.0
        %901 = vmatpush1.msra.mxu0 0.0
        %902 = vmatprep.subr.mxu0 0.0
        %903 = vmatpush1.msra.mxu0 0.0
        %904 = vmatprep.subr.mxu0 0.0
        %905 = vmatpush1.msra.mxu0 0.0
        %906 = vmatprep.subr.mxu0 0.0
        %907 = vmatpush1.msra.mxu0 0.0
        %908 = vmatprep.subr.mxu0 0.0
        %909 = vmatpush1.msra.mxu0 0.0
        %910 = vmatprep.subr.mxu0 0.0
        %911 = vmatpush1.msra.mxu0 0.0
        %912 = vmatprep.subr.mxu0 0.0
        %913 = vmatpush1.msra.mxu0 0.0
        %914 = vmatprep.subr.mxu0 0.0
        %915 = vmatpush1.msra.mxu0 0.0
        %916 = vmatprep.subr.mxu0 0.0
        %917 = vmatpush1.msra.mxu0 %v894
        %918 = vmatprep.subr.mxu0 0.0
        %919 = vmatpush1.msra.mxu0 %v873
        %920 = vmatprep.subr.mxu0 0.0
        %921 = vmatpush1.msra.mxu0 %v872
        %922 = vmatprep.subr.mxu0 0.0
        %923 = vmatpush1.msra.mxu0 %v871
        %924 = vmatprep.subr.mxu0 0.0
        %925 = vmatpush1.msra.mxu0 %v870
        %926 = vmatprep.subr.mxu0 0.0
        %927 = vmatpush1.msra.mxu0 %v869
        %928 = vmatprep.subr.mxu0 0.0
        %929 = vmatpush2.msra.mxu0 0.0
        %930 = vmatprep.subr.mxu0 0.0
        %931 = vmatpush2.msra.mxu0 0.0
        %932 = vmatprep.subr.mxu0 0.0
        %933 = vmatpush2.msra.mxu0 0.0
        %934 = vmatprep.subr.mxu0 0.0
        %935 = vmatpush2.msra.mxu0 0.0
        %936 = vmatprep.subr.mxu0 0.0
        %937 = vmatpush2.msra.mxu0 0.0
        %938 = vmatprep.subr.mxu0 0.0
        %939 = vmatpush2.msra.mxu0 0.0
        %940 = vmatprep.subr.mxu0 0.0
        %941 = vmatpush2.msra.mxu0 0.0
        %942 = vmatprep.subr.mxu0 0.0
        %943 = vmatpush2.msra.mxu0 0.0
        %944 = vmatprep.subr.mxu0 0.0
        %945 = vmatpush2.msra.mxu0 0.0
        %946 = vmatprep.subr.mxu0 0.0
        %947 = vmatpush2.msra.mxu0 0.0
        %948 = vmatprep.subr.mxu0 0.0
        %949 = vmatpush2.msra.mxu0 0.0
        %950 = vmatprep.subr.mxu0 0.0
        %951 = vmatpush2.msra.mxu0 0.0
        %952 = vmatprep.subr.mxu0 0.0
        %953 = vmatpush2.msra.mxu0 0.0
        %954 = vmatprep.subr.mxu0 0.0
        %955 = vmatpush2.msra.mxu0 0.0
        %956 = vmatprep.subr.mxu0 0.0
        %957 = vmatpush2.msra.mxu0 0.0
        %958 = vmatprep.subr.mxu0 0.0
        %959 = vmatpush2.msra.mxu0 0.0
        %960 = vmatprep.mubr.f32.mxu0 0.0
        %961 = vmatmul.mubr.f32.gmra.mxu0 %v876
        %v962 = vpop.f32.mrf.mxu0
        %v963 = vadd.f32 0.0, %v962
        %v964 = vpop.f32.mrf.mxu0
        %965 = vmatprep.mubr.f32.mxu0 0.0
        %966 = vmatmul.mubr.f32.gmra.mxu0 %v879
        %v967 = vpop.f32.mrf.mxu0
        %v968 = vadd.f32 0.0, %v967
        %v969 = vpop.f32.mrf.mxu0
        %970 = vmatprep.mubr.f32.mxu0 0.0
        %971 = vmatmul.mubr.f32.gmra.mxu0 %v882
        %v972 = vpop.f32.mrf.mxu0
        %v973 = vadd.f32 0.0, %v972
        %v974 = vpop.f32.mrf.mxu0
        %975 = vmatprep.mubr.f32.mxu0 0.0
        %976 = vmatmul.mubr.f32.gmra.mxu0 %v885
        %v977 = vpop.f32.mrf.mxu0
        %v978 = vadd.f32 0.0, %v977
        %v979 = vpop.f32.mrf.mxu0
        %980 = vmatprep.mubr.f32.mxu0 0.0
        %981 = vmatmul.mubr.f32.gmra.mxu0 %v888
        %v982 = vpop.f32.mrf.mxu0
        %v983 = vadd.f32 0.0, %v982
        %v984 = vpop.f32.mrf.mxu0
        %985 = vmatprep.mubr.f32.mxu0 0.0
        %986 = vmatmul.mubr.f32.gmra.mxu0 %v891
        %v987 = vpop.f32.mrf.mxu0
        %v988 = vadd.f32 0.0, %v987
        %v989 = vpop.f32.mrf.mxu0
        %990 = vdwg.mxu0
        %v991 = vadd.f32 %v840, %v963
        %v992 = vadd.f32 %v845, %v968
        %v993 = vadd.f32 %v850, %v973
        %v994 = vadd.f32 %v855, %v978
        %v995 = vadd.f32 %v860, %v983
        %v996 = vadd.f32 %v865, %v988
        %s997 = scalar_lea.vmem %s3, 144
        %v998 = vld [vmem:[%s997] sm:$0xff]
        %v999 = vld [vmem:[%s997 + $0x8] sm:$0xff]
        %v1000 = vld [vmem:[%s997 + $0x10] sm:$0xff]
        %v1001 = vld [vmem:[%s997 + $0x18] sm:$0xff]
        %v1002 = vld [vmem:[%s997 + $0x20] sm:$0xff]
        %v1003 = vld [vmem:[%s997 + $0x28] sm:$0x3f]
        %v1005 = vsel %vm521, %v372, 0
        %v1008 = vsel %vm521, %v373, 0
        %v1011 = vsel %vm521, %v374, 0
        %v1014 = vsel %vm521, %v375, 0
        %v1017 = vsel %vm521, %v376, 0
        %v1020 = vsel %vm521, %v377, 0
        %v1023 = vsel %vm534, %v1003, 0
        %1025 = vmatprep.subr.mxu0 0.0
        %1026 = vmatpush1.msra.mxu0 0.0
        %1027 = vmatprep.subr.mxu0 0.0
        %1028 = vmatpush1.msra.mxu0 0.0
        %1029 = vmatprep.subr.mxu0 0.0
        %1030 = vmatpush1.msra.mxu0 0.0
        %1031 = vmatprep.subr.mxu0 0.0
        %1032 = vmatpush1.msra.mxu0 0.0
        %1033 = vmatprep.subr.mxu0 0.0
        %1034 = vmatpush1.msra.mxu0 0.0
        %1035 = vmatprep.subr.mxu0 0.0
        %1036 = vmatpush1.msra.mxu0 0.0
        %1037 = vmatprep.subr.mxu0 0.0
        %1038 = vmatpush1.msra.mxu0 0.0
        %1039 = vmatprep.subr.mxu0 0.0
        %1040 = vmatpush1.msra.mxu0 0.0
        %1041 = vmatprep.subr.mxu0 0.0
        %1042 = vmatpush1.msra.mxu0 0.0
        %1043 = vmatprep.subr.mxu0 0.0
        %1044 = vmatpush1.msra.mxu0 0.0
        %1045 = vmatprep.subr.mxu0 0.0
        %1046 = vmatpush1.msra.mxu0 %v1023
        %1047 = vmatprep.subr.mxu0 0.0
        %1048 = vmatpush1.msra.mxu0 %v1002
        %1049 = vmatprep.subr.mxu0 0.0
        %1050 = vmatpush1.msra.mxu0 %v1001
        %1051 = vmatprep.subr.mxu0 0.0
        %1052 = vmatpush1.msra.mxu0 %v1000
        %1053 = vmatprep.subr.mxu0 0.0
        %1054 = vmatpush1.msra.mxu0 %v999
        %1055 = vmatprep.subr.mxu0 0.0
        %1056 = vmatpush1.msra.mxu0 %v998
        %1057 = vmatprep.subr.mxu0 0.0
        %1058 = vmatpush2.msra.mxu0 0.0
        %1059 = vmatprep.subr.mxu0 0.0
        %1060 = vmatpush2.msra.mxu0 0.0
        %1061 = vmatprep.subr.mxu0 0.0
        %1062 = vmatpush2.msra.mxu0 0.0
        %1063 = vmatprep.subr.mxu0 0.0
        %1064 = vmatpush2.msra.mxu0 0.0
        %1065 = vmatprep.subr.mxu0 0.0
        %1066 = vmatpush2.msra.mxu0 0.0
        %1067 = vmatprep.subr.mxu0 0.0
        %1068 = vmatpush2.msra.mxu0 0.0
        %1069 = vmatprep.subr.mxu0 0.0
        %1070 = vmatpush2.msra.mxu0 0.0
        %1071 = vmatprep.subr.mxu0 0.0
        %1072 = vmatpush2.msra.mxu0 0.0
        %1073 = vmatprep.subr.mxu0 0.0
        %1074 = vmatpush2.msra.mxu0 0.0
        %1075 = vmatprep.subr.mxu0 0.0
        %1076 = vmatpush2.msra.mxu0 0.0
        %1077 = vmatprep.subr.mxu0 0.0
        %1078 = vmatpush2.msra.mxu0 0.0
        %1079 = vmatprep.subr.mxu0 0.0
        %1080 = vmatpush2.msra.mxu0 0.0
        %1081 = vmatprep.subr.mxu0 0.0
        %1082 = vmatpush2.msra.mxu0 0.0
        %1083 = vmatprep.subr.mxu0 0.0
        %1084 = vmatpush2.msra.mxu0 0.0
        %1085 = vmatprep.subr.mxu0 0.0
        %1086 = vmatpush2.msra.mxu0 0.0
        %1087 = vmatprep.subr.mxu0 0.0
        %1088 = vmatpush2.msra.mxu0 0.0
        %1089 = vmatprep.mubr.f32.mxu0 0.0
        %1090 = vmatmul.mubr.f32.gmra.mxu0 %v1005
        %v1091 = vpop.f32.mrf.mxu0
        %v1092 = vadd.f32 0.0, %v1091
        %v1093 = vpop.f32.mrf.mxu0
        %1094 = vmatprep.mubr.f32.mxu0 0.0
        %1095 = vmatmul.mubr.f32.gmra.mxu0 %v1008
        %v1096 = vpop.f32.mrf.mxu0
        %v1097 = vadd.f32 0.0, %v1096
        %v1098 = vpop.f32.mrf.mxu0
        %1099 = vmatprep.mubr.f32.mxu0 0.0
        %1100 = vmatmul.mubr.f32.gmra.mxu0 %v1011
        %v1101 = vpop.f32.mrf.mxu0
        %v1102 = vadd.f32 0.0, %v1101
        %v1103 = vpop.f32.mrf.mxu0
        %1104 = vmatprep.mubr.f32.mxu0 0.0
        %1105 = vmatmul.mubr.f32.gmra.mxu0 %v1014
        %v1106 = vpop.f32.mrf.mxu0
        %v1107 = vadd.f32 0.0, %v1106
        %v1108 = vpop.f32.mrf.mxu0
        %1109 = vmatprep.mubr.f32.mxu0 0.0
        %1110 = vmatmul.mubr.f32.gmra.mxu0 %v1017
        %v1111 = vpop.f32.mrf.mxu0
        %v1112 = vadd.f32 0.0, %v1111
        %v1113 = vpop.f32.mrf.mxu0
        %1114 = vmatprep.mubr.f32.mxu0 0.0
        %1115 = vmatmul.mubr.f32.gmra.mxu0 %v1020
        %v1116 = vpop.f32.mrf.mxu0
        %v1117 = vadd.f32 0.0, %v1116
        %v1118 = vpop.f32.mrf.mxu0
        %1119 = vdwg.mxu0
        %v1120 = vadd.f32 %v991, %v1092
        %v1121 = vadd.f32 %v992, %v1097
        %v1122 = vadd.f32 %v993, %v1102
        %v1123 = vadd.f32 %v994, %v1107
        %v1124 = vadd.f32 %v995, %v1112
        %v1125 = vadd.f32 %v996, %v1117
        %v1126 = vlaneseq
        %v1127 = vshrl.u32 %v1126, 7
        %v1128 = vadd.s32 %v1127, 8
        %v1129 = vadd.s32 %v1127, 16
        %v1130 = vadd.s32 %v1127, 24
        %v1131 = vadd.s32 %v1127, 32
        %v1132 = vadd.s32 %v1127, 40
        %vm1133 = vcmp.ge.s32.totalorder %v1127, 7
        %vm1134 = vcmp.ge.s32.totalorder %v1128, 7
        %vm1135 = vcmp.ge.s32.totalorder %v1129, 7
        %vm1136 = vcmp.ge.s32.totalorder %v1130, 7
        %vm1137 = vcmp.ge.s32.totalorder %v1131, 7
        %vm1138 = vcmp.ge.s32.totalorder %v1132, 7
        %vm1139 = vcmp.lt.s32.totalorder %v1127, 39
        %vm1140 = vcmp.lt.s32.totalorder %v1128, 39
        %vm1141 = vcmp.lt.s32.totalorder %v1129, 39
        %vm1142 = vcmp.lt.s32.totalorder %v1130, 39
        %vm1143 = vcmp.lt.s32.totalorder %v1131, 39
        %vm1144 = vcmp.lt.s32.totalorder %v1132, 39
        %vm1145 = vmand %vm1133, %vm1139
        %vm1146 = vmand %vm1134, %vm1140
        %vm1147 = vmand %vm1135, %vm1141
        %vm1148 = vmand %vm1136, %vm1142
        %vm1149 = vmand %vm1137, %vm1143
        %vm1150 = vmand %vm1138, %vm1144
        %s1151 = sld [smem:[#allocation2 + $0x2]]
        %v1152 = vstv %s1151
        %v1153 = vadd.f32 %v1120, %v1152
        %v1154 = vadd.f32 %v1121, %v1152
        %v1155 = vadd.f32 %v1122, %v1152
        %v1156 = vadd.f32 %v1123, %v1152
        %v1157 = vadd.f32 %v1124, %v1152
        %v1158 = vadd.f32 %v1125, %v1152
        %v1159 = vsel %vm1145, 1, 0
        %v1160 = vsel %vm1146, 1, 0
        %v1161 = vsel %vm1147, 1, 0
        %v1162 = vsel %vm1148, 1, 0
        %v1163 = vsel %vm1149, 1, 0
        %v1164 = vsel %vm1150, 1, 0
        %vm1165 = vcmp.eq.s32.totalorder %v1159, 1
        %vm1166 = vcmp.eq.s32.totalorder %v1160, 1
        %vm1167 = vcmp.eq.s32.totalorder %v1161, 1
        %vm1168 = vcmp.eq.s32.totalorder %v1162, 1
        %vm1169 = vcmp.eq.s32.totalorder %v1163, 1
        %vm1170 = vcmp.eq.s32.totalorder %v1164, 1
        %v1171 = vsel %vm1165, %v1153, 0.0
        %v1172 = vsel %vm1166, %v1154, 0.0
        %v1173 = vsel %vm1167, %v1155, 0.0
        %v1174 = vsel %vm1168, %v1156, 0.0
        %v1175 = vsel %vm1169, %v1157, 0.0
        %v1176 = vsel %vm1170, %v1158, 0.0
        %v1177 = vld [vmem:[%s4] sm:$0xff]
        %v1178 = vld [vmem:[%s4 + $0x8] sm:$0xff]
        %v1179 = vld [vmem:[%s4 + $0x10] sm:$0xff]
        %v1180 = vld [vmem:[%s4 + $0x18] sm:$0xff]
        %s1181 = sld [smem:[#allocation2 + $0x3]]
        %v1182 = vstv %s1181
        %vm1183 = vcmask 392192
        %v1185 = vsel %vm1183, %v1177, 0
        %v1188 = vsel %vm1183, %v1178, 0
        %v1191 = vsel %vm1183, %v1179, 0
        %v1194 = vsel %vm1183, %v1180, 0
        %1196 = vmatprep.subr.mxu0 0.0
        %1197 = vmatpush1.msra.mxu0 0.0
        %1198 = vmatprep.subr.mxu0 0.0
        %1199 = vmatpush1.msra.mxu0 0.0
        %1200 = vmatprep.subr.mxu0 0.0
        %1201 = vmatpush1.msra.mxu0 0.0
        %1202 = vmatprep.subr.mxu0 0.0
        %1203 = vmatpush1.msra.mxu0 0.0
        %1204 = vmatprep.subr.mxu0 0.0
        %1205 = vmatpush1.msra.mxu0 0.0
        %1206 = vmatprep.subr.mxu0 0.0
        %1207 = vmatpush1.msra.mxu0 0.0
        %1208 = vmatprep.subr.mxu0 0.0
        %1209 = vmatpush1.msra.mxu0 0.0
        %1210 = vmatprep.subr.mxu0 0.0
        %1211 = vmatpush1.msra.mxu0 0.0
        %1212 = vmatprep.subr.mxu0 0.0
        %1213 = vmatpush1.msra.mxu0 0.0
        %1214 = vmatprep.subr.mxu0 0.0
        %1215 = vmatpush1.msra.mxu0 0.0
        %1216 = vmatprep.subr.mxu0 0.0
        %1217 = vmatpush1.msra.mxu0 %v1176
        %1218 = vmatprep.subr.mxu0 0.0
        %1219 = vmatpush1.msra.mxu0 %v1175
        %1220 = vmatprep.subr.mxu0 0.0
        %1221 = vmatpush1.msra.mxu0 %v1174
        %1222 = vmatprep.subr.mxu0 0.0
        %1223 = vmatpush1.msra.mxu0 %v1173
        %1224 = vmatprep.subr.mxu0 0.0
        %1225 = vmatpush1.msra.mxu0 %v1172
        %1226 = vmatprep.subr.mxu0 0.0
        %1227 = vmatpush1.msra.mxu0 %v1171
        %1228 = vmatprep.subr.mxu0 0.0
        %1229 = vmatpush2.msra.mxu0 0.0
        %1230 = vmatprep.subr.mxu0 0.0
        %1231 = vmatpush2.msra.mxu0 0.0
        %1232 = vmatprep.subr.mxu0 0.0
        %1233 = vmatpush2.msra.mxu0 0.0
        %1234 = vmatprep.subr.mxu0 0.0
        %1235 = vmatpush2.msra.mxu0 0.0
        %1236 = vmatprep.subr.mxu0 0.0
        %1237 = vmatpush2.msra.mxu0 0.0
        %1238 = vmatprep.subr.mxu0 0.0
        %1239 = vmatpush2.msra.mxu0 0.0
        %1240 = vmatprep.subr.mxu0 0.0
        %1241 = vmatpush2.msra.mxu0 0.0
        %1242 = vmatprep.subr.mxu0 0.0
        %1243 = vmatpush2.msra.mxu0 0.0
        %1244 = vmatprep.subr.mxu0 0.0
        %1245 = vmatpush2.msra.mxu0 0.0
        %1246 = vmatprep.subr.mxu0 0.0
        %1247 = vmatpush2.msra.mxu0 0.0
        %1248 = vmatprep.subr.mxu0 0.0
        %1249 = vmatpush2.msra.mxu0 0.0
        %1250 = vmatprep.subr.mxu0 0.0
        %1251 = vmatpush2.msra.mxu0 0.0
        %1252 = vmatprep.subr.mxu0 0.0
        %1253 = vmatpush2.msra.mxu0 0.0
        %1254 = vmatprep.subr.mxu0 0.0
        %1255 = vmatpush2.msra.mxu0 0.0
        %1256 = vmatprep.subr.mxu0 0.0
        %1257 = vmatpush2.msra.mxu0 0.0
        %1258 = vmatprep.subr.mxu0 0.0
        %1259 = vmatpush2.msra.mxu0 0.0
        %1260 = vmatprep.mubr.f32.mxu0 0.0
        %1261 = vmatmul.mubr.f32.gmra.mxu0 %v1185
        %v1262 = vpop.f32.mrf.mxu0
        %v1263 = vadd.f32 %v1182, %v1262
        %v1264 = vpop.f32.mrf.mxu0
        %1265 = vmatprep.mubr.f32.mxu0 0.0
        %1266 = vmatmul.mubr.f32.gmra.mxu0 %v1188
        %v1267 = vpop.f32.mrf.mxu0
        %v1268 = vadd.f32 %v1182, %v1267
        %v1269 = vpop.f32.mrf.mxu0
        %1270 = vmatprep.mubr.f32.mxu0 0.0
        %1271 = vmatmul.mubr.f32.gmra.mxu0 %v1191
        %v1272 = vpop.f32.mrf.mxu0
        %v1273 = vadd.f32 %v1182, %v1272
        %v1274 = vpop.f32.mrf.mxu0
        %1275 = vmatprep.mubr.f32.mxu0 0.0
        %1276 = vmatmul.mubr.f32.gmra.mxu0 %v1194
        %v1277 = vpop.f32.mrf.mxu0
        %v1278 = vadd.f32 %v1182, %v1277
        %v1279 = vpop.f32.mrf.mxu0
        %1280 = vdwg.mxu0
        %v1281 = vadd.f32 %v605, %v1263
        %v1282 = vadd.f32 %v610, %v1268
        %v1283 = vadd.f32 %v615, %v1273
        %v1284 = vadd.f32 %v620, %v1278
        %vm1285 = vcmask 261120
        %1286 = vst.msk [vmem:[%s340] sm:$0xff] %vm1285, %v1281
        %1287 = vst.msk [vmem:[%s340 + $0x8] sm:$0xff] %vm1285, %v1282
        %1288 = vst.msk [vmem:[%s340 + $0x10] sm:$0xff] %vm1285, %v1283
        %1289 = vst.msk [vmem:[%s340 + $0x18] sm:$0xff] %vm1285, %v1284
        %v1290 = vld [vmem:[%s5] sm:$0x1]
        %v1292 = vsel %vm1285, %v1290, 0
        %1294 = vmatprep.subr.mxu0 0.0
        %1295 = vmatpush1.msra.mxu0 0.0
        %1296 = vmatprep.subr.mxu0 0.0
        %1297 = vmatpush1.msra.mxu0 0.0
        %1298 = vmatprep.subr.mxu0 0.0
        %1299 = vmatpush1.msra.mxu0 0.0
        %1300 = vmatprep.subr.mxu0 0.0
        %1301 = vmatpush1.msra.mxu0 0.0
        %1302 = vmatprep.subr.mxu0 0.0
        %1303 = vmatpush1.msra.mxu0 0.0
        %1304 = vmatprep.subr.mxu0 0.0
        %1305 = vmatpush1.msra.mxu0 0.0
        %1306 = vmatprep.subr.mxu0 0.0
        %1307 = vmatpush1.msra.mxu0 0.0
        %1308 = vmatprep.subr.mxu0 0.0
        %1309 = vmatpush1.msra.mxu0 0.0
        %1310 = vmatprep.subr.mxu0 0.0
        %1311 = vmatpush1.msra.mxu0 0.0
        %1312 = vmatprep.subr.mxu0 0.0
        %1313 = vmatpush1.msra.mxu0 0.0
        %1314 = vmatprep.subr.mxu0 0.0
        %1315 = vmatpush1.msra.mxu0 0.0
        %1316 = vmatprep.subr.mxu0 0.0
        %1317 = vmatpush1.msra.mxu0 0.0
        %1318 = vmatprep.subr.mxu0 0.0
        %1319 = vmatpush1.msra.mxu0 %v1284
        %1320 = vmatprep.subr.mxu0 0.0
        %1321 = vmatpush1.msra.mxu0 %v1283
        %1322 = vmatprep.subr.mxu0 0.0
        %1323 = vmatpush1.msra.mxu0 %v1282
        %1324 = vmatprep.subr.mxu0 0.0
        %1325 = vmatpush1.msra.mxu0 %v1281
        %1326 = vmatprep.subr.mxu0 0.0
        %1327 = vmatpush2.msra.mxu0 0.0
        %1328 = vmatprep.subr.mxu0 0.0
        %1329 = vmatpush2.msra.mxu0 0.0
        %1330 = vmatprep.subr.mxu0 0.0
        %1331 = vmatpush2.msra.mxu0 0.0
        %1332 = vmatprep.subr.mxu0 0.0
        %1333 = vmatpush2.msra.mxu0 0.0
        %1334 = vmatprep.subr.mxu0 0.0
        %1335 = vmatpush2.msra.mxu0 0.0
        %1336 = vmatprep.subr.mxu0 0.0
        %1337 = vmatpush2.msra.mxu0 0.0
        %1338 = vmatprep.subr.mxu0 0.0
        %1339 = vmatpush2.msra.mxu0 0.0
        %1340 = vmatprep.subr.mxu0 0.0
        %1341 = vmatpush2.msra.mxu0 0.0
        %1342 = vmatprep.subr.mxu0 0.0
        %1343 = vmatpush2.msra.mxu0 0.0
        %1344 = vmatprep.subr.mxu0 0.0
        %1345 = vmatpush2.msra.mxu0 0.0
        %1346 = vmatprep.subr.mxu0 0.0
        %1347 = vmatpush2.msra.mxu0 0.0
        %1348 = vmatprep.subr.mxu0 0.0
        %1349 = vmatpush2.msra.mxu0 0.0
        %1350 = vmatprep.subr.mxu0 0.0
        %1351 = vmatpush2.msra.mxu0 0.0
        %1352 = vmatprep.subr.mxu0 0.0
        %1353 = vmatpush2.msra.mxu0 0.0
        %1354 = vmatprep.subr.mxu0 0.0
        %1355 = vmatpush2.msra.mxu0 0.0
        %1356 = vmatprep.subr.mxu0 0.0
        %1357 = vmatpush2.msra.mxu0 0.0
        %1358 = vmatprep.mubr.f32.mxu0 0.0
        %1359 = vmatmul.mubr.f32.gmra.mxu0 %v1292
        %v1360 = vpop.f32.mrf.mxu0
        %v1361 = vadd.f32 0.0, %v1360
        %v1362 = vpop.f32.mrf.mxu0
        %1363 = vdwg.mxu0
        %v1364 = vld [vmem:[%s6] sm:$0xff]
        %v1365 = vld [vmem:[%s6 + $0x8] sm:$0xff]
        %v1366 = vld [vmem:[%s6 + $0x10] sm:$0xff]
        %v1367 = vld [vmem:[%s6 + $0x18] sm:$0xff]
        %v1369 = vsel %vm1285, %v1361, 0
        %1371 = vmatprep.subr.mxu0 0.0
        %1372 = vmatpush1.msra.mxu0 0.0
        %1373 = vmatprep.subr.mxu0 0.0
        %1374 = vmatpush1.msra.mxu0 0.0
        %1375 = vmatprep.subr.mxu0 0.0
        %1376 = vmatpush1.msra.mxu0 0.0
        %1377 = vmatprep.subr.mxu0 0.0
        %1378 = vmatpush1.msra.mxu0 0.0
        %1379 = vmatprep.subr.mxu0 0.0
        %1380 = vmatpush1.msra.mxu0 0.0
        %1381 = vmatprep.subr.mxu0 0.0
        %1382 = vmatpush1.msra.mxu0 0.0
        %1383 = vmatprep.subr.mxu0 0.0
        %1384 = vmatpush1.msra.mxu0 0.0
        %1385 = vmatprep.subr.mxu0 0.0
        %1386 = vmatpush1.msra.mxu0 0.0
        %1387 = vmatprep.subr.mxu0 0.0
        %1388 = vmatpush1.msra.mxu0 0.0
        %1389 = vmatprep.subr.mxu0 0.0
        %1390 = vmatpush1.msra.mxu0 0.0
        %1391 = vmatprep.subr.mxu0 0.0
        %1392 = vmatpush1.msra.mxu0 0.0
        %1393 = vmatprep.subr.mxu0 0.0
        %1394 = vmatpush1.msra.mxu0 0.0
        %1395 = vmatprep.subr.mxu0 0.0
        %1396 = vmatpush1.msra.mxu0 %v1367
        %1397 = vmatprep.subr.mxu0 0.0
        %1398 = vmatpush1.msra.mxu0 %v1366
        %1399 = vmatprep.subr.mxu0 0.0
        %1400 = vmatpush1.msra.mxu0 %v1365
        %1401 = vmatprep.subr.mxu0 0.0
        %1402 = vmatpush1.msra.mxu0 %v1364
        %1403 = vmatprep.subr.mxu0 0.0
        %1404 = vmatpush2.msra.mxu0 0.0
        %1405 = vmatprep.subr.mxu0 0.0
        %1406 = vmatpush2.msra.mxu0 0.0
        %1407 = vmatprep.subr.mxu0 0.0
        %1408 = vmatpush2.msra.mxu0 0.0
        %1409 = vmatprep.subr.mxu0 0.0
        %1410 = vmatpush2.msra.mxu0 0.0
        %1411 = vmatprep.subr.mxu0 0.0
        %1412 = vmatpush2.msra.mxu0 0.0
        %1413 = vmatprep.subr.mxu0 0.0
        %1414 = vmatpush2.msra.mxu0 0.0
        %1415 = vmatprep.subr.mxu0 0.0
        %1416 = vmatpush2.msra.mxu0 0.0
        %1417 = vmatprep.subr.mxu0 0.0
        %1418 = vmatpush2.msra.mxu0 0.0
        %1419 = vmatprep.subr.mxu0 0.0
        %1420 = vmatpush2.msra.mxu0 0.0
        %1421 = vmatprep.subr.mxu0 0.0
        %1422 = vmatpush2.msra.mxu0 0.0
        %1423 = vmatprep.subr.mxu0 0.0
        %1424 = vmatpush2.msra.mxu0 0.0
        %1425 = vmatprep.subr.mxu0 0.0
        %1426 = vmatpush2.msra.mxu0 0.0
        %1427 = vmatprep.subr.mxu0 0.0
        %1428 = vmatpush2.msra.mxu0 0.0
        %1429 = vmatprep.subr.mxu0 0.0
        %1430 = vmatpush2.msra.mxu0 0.0
        %1431 = vmatprep.subr.mxu0 0.0
        %1432 = vmatpush2.msra.mxu0 0.0
        %1433 = vmatprep.subr.mxu0 0.0
        %1434 = vmatpush2.msra.mxu0 0.0
        %1435 = vmatprep.mubr.f32.mxu0 0.0
        %1436 = vmatmul.mubr.f32.gmra.mxu0 %v1369
        %v1437 = vpop.f32.mrf.mxu0
        %v1438 = vadd.f32 0.0, %v1437
        %v1439 = vpop.f32.mrf.mxu0
        %1440 = vdwg.mxu0
        %v1441 = vmul.f32 %v1438, 0.0009765625
        %vm1442 = vcmask 0
        %1443 = vst.msk [vmem:[%s353] sm:$0x1] %vm1442, %v1441
        %s1444 = sand.u32 %s206, 1
        %s1445 = scalar_lea.sflag [#allocation3], %s1444
        %s1446 = sand.u32 %s206, 1
        %s1447 = smul.addr %s1446, 32
        %s1448 = scalar_lea.vmem [#allocation5], %s1447
        %p1449 = scmp.lt.s32.totalorder %s25, 1
        %s1450 = scalar_select %p1449, %s25, 1
        %s1451 = scalar_lea.vmem %s9, %s1450
        // Predicated region
        $region57: #{pfe_forward.1} parent=51 // pred_check
          %p1452 = pneg %p216
        $region58: #{pfe_forward.1} parent=51 // pred_check_branch
          %1454 = sbr.rel (%p1452) target = $region60
        $region59: #{pfe_forward.1} parent=51 // pred_region
          %s1456 = ssub.s32 512, 512
          %1457 = vsyncadd %s1445, %s1456
          %s1458 = smul.addr %s25, 4
          %s1459 = smul.addr %s1458, 128
          %s1460 = scalar_lea.hbm %s8, %s1459
          %s1461 = sshll.u32 %s1448, 4
          %s1462 = int_to_ptr.vmem [resolvable:$true] %s1461
          %1467 = dma.vmem_to_hbm [thread:$0]  %s1462, 512, %s1460, %s1445, 128, 128, 8
        $region60: #{pfe_forward.1} parent=51 // pred_fallthru
          _
        // Predicated region
        $region61: #{pfe_forward.1} parent=51 // pred_check
          %p1468 = pneg %p242
        $region62: #{pfe_forward.1} parent=51 // pred_check_branch
          %1470 = sbr.rel (%p1468) target = $region64
        $region63: #{pfe_forward.1} parent=51 // pred_region
          _
        $region64: #{pfe_forward.1} parent=51 // pred_fallthru
          _
      $region52: #{pfe_forward.1} parent=5 // pred_fallthru
        _
      %p1471 = scmp.le.s32.totalorder 2, %s20
      // Predicated region
      $region65: #{pfe_forward.1} parent=5 // pred_check
        %p1472 = pneg %p1471
      $region66: #{pfe_forward.1} parent=5 // pred_check_branch
        %1474 = sbr.rel (%p1472) target = $region68
      $region67: #{pfe_forward.1} parent=5 // pred_region
        %s1475 = ssub.s32 %s20, 2
        // Predicated region
        $region69: #{pfe_forward.1} parent=67 // pred_check
          %p1476 = pneg %p222
        $region70: #{pfe_forward.1} parent=67 // pred_check_branch
          %1478 = sbr.rel (%p1476) target = $region72
        $region71: #{pfe_forward.1} parent=67 // pred_region
          %s1479 = sand.u32 %s207, 1
          %s1480 = scalar_lea.sflag [#allocation3], %s1479
          %s1481 = sand.u32 %s207, 1
          %s1482 = smul.addr %s1481, 32
          %s1483 = scalar_lea.vmem [#allocation5], %s1482
          %1484 = dma.done %s1480, 512
        $region72: #{pfe_forward.1} parent=67 // pred_fallthru
          _
        // Predicated region
        $region73: #{pfe_forward.1} parent=67 // pred_check
          %p1485 = pneg %p248
        $region74: #{pfe_forward.1} parent=67 // pred_check_branch
          %1487 = sbr.rel (%p1485) target = $region76
        $region75: #{pfe_forward.1} parent=67 // pred_region
          %p1488 = scmp.lt.s32.totalorder %s26, 1
          %s1489 = scalar_select %p1488, %s26, 1
          %s1490 = scalar_lea.vmem %s9, %s1489
        $region76: #{pfe_forward.1} parent=67 // pred_fallthru
          _
      $region68: #{pfe_forward.1} parent=5 // pred_fallthru
        _
    $region6: #{pfe_forward.1} parent=1 // loop_footer
      %s24 = sadd.s32 1, %s20
    $region7: #{pfe_forward.1} parent=1 // loop_footer_branch
      %19 = sbr.rel target = $region3
    $region8: #{pfe_forward.1} parent=1 // loop_exit
      _
    %1491 = vsyncpa [#allocation3], 1
    %s1492 = scalar_lea.sflag [#allocation3], 1
    %1493 = vsyncpa %s1492, 1
    %1494 = vsyncpa [#allocation4], 1
    %s1495 = scalar_lea.sflag [#allocation4], 1
    %1496 = vsyncpa %s1495, 1

</llo_original>
